<compile_context>
chip_gen: v5e
topology: v5e:2x2
jax: 0.10.0
libtpu: 0.0.40
codegen_flags: <defaults>
</compile_context>

<pallas_src>
from functools import partial

import jax
import jax.numpy as jnp
from jax.experimental import pallas as pl
from jax.experimental.pallas import tpu as pltpu


def resblock_kernel(x_ref, masks_ref, w1_ref, w2_ref, o_ref, col_ref, *,
                    W, K, res_scale):
    # x_ref    : (Cin, L)           L = N*H*W, lane-dense spatial+batch axis
    # masks_ref: (K*K, Cin, L)      0/1 f32 "same"-padding masks, one per tap
    # w*_ref   : (Cout, K*K*CPAD)   packed im2col weights, bias in column Cin
    # o_ref    : (Cout, L)
    # col_ref  : (K*K*CPAD, L)      f32 im2col scratch (VMEM)
    cin, L = x_ref.shape
    p = K // 2
    CPAD = col_ref.shape[0] // (K * K)

    # Zero the im2col scratch once; the pad rows stay zero through both convs
    # (per-tap stores only touch rows [t*CPAD, t*CPAD + cin)).
    col_ref[...] = jnp.zeros_like(col_ref)
    # Bias row: all ones.  The bias sits in the matching packed-weight column,
    # so the bias add rides the single MXU matmul of each conv.
    col_ref[pl.ds(cin, 1), :] = jnp.ones((1, L), jnp.float32)

    x = x_ref[...].astype(jnp.float32)                        # (Cin, L)

    def conv_same(inp, w_ref):
        # Build the im2col stack: one shifted+masked tap per 8-sublane block.
        for kh in range(K):
            dh = kh - p
            for kw in range(K):
                dw = kw - p
                t = kh * K + kw
                d = dh * W + dw                               # flattened offset
                if d == 0:
                    shifted = inp
                else:
                    # shifted[c, i] = inp[c, i + d]  (lane roll on the XLU);
                    # out-of-image / cross-image taps zeroed by the mask.
                    rolled = pltpu.roll(inp, shift=(-d) % L, axis=1)
                    shifted = rolled * masks_ref[t]
                col_ref[pl.ds(t * CPAD, cin), :] = shifted
        # One MXU matmul per conv, f32 accumulation, bias folded in.
        return jnp.dot(w_ref[...], col_ref[...],
                       preferred_element_type=jnp.float32)    # (Cout, L)

    y = jnp.maximum(conv_same(x, w1_ref), 0.0)                # conv1 + bias + ReLU
    res = conv_same(y, w2_ref)                                # conv2 + bias
    o_ref[...] = (res * res_scale + x).astype(o_ref.dtype)    # residual


def resblock_forward(x_nchw, w1, b1, w2, b2, *, res_scale=1.0):
    """x_nchw: (N, Cin, H, W); w*: (K, K, Cin, Cout) HWIO; b*: (Cout,)."""
    N, cin, H, W = x_nchw.shape
    K, _, _, cout = w1.shape
    assert cout == cin, "residual add requires n_feat == in_feat"
    HW = H * W
    L = N * HW
    p = K // 2
    # 8-sublane-aligned channel block per tap, with >=1 spare row for the bias.
    CPAD = 8 * pl.cdiv(cin + 1, 8)

    # Lane-dense layout with the whole batch on the lane axis: (Cin, N*H*W).
    x2d = jnp.transpose(x_nchw, (1, 0, 2, 3)).reshape(cin, L)

    # Precompute the K*K "same"-padding boundary masks (resident VMEM input).
    # Per-image row/col (pos % HW) also kills any cross-image roll wrap.
    pos = jnp.arange(L, dtype=jnp.int32) % HW
    row = pos // W
    col = pos % W
    mask_list = []
    for dh in range(-p, p + 1):
        hm = (row + dh >= 0) & (row + dh < H)
        for dw in range(-p, p + 1):
            wm = (col + dw >= 0) & (col + dw < W)
            mask_list.append((hm & wm).astype(jnp.float32))
    masks = jnp.broadcast_to(jnp.stack(mask_list)[:, None, :],
                             (K * K, cin, L))

    def pack_weight(w, b):
        # (K, K, Cin, Cout) HWIO -> (Cout, K*K*CPAD): zero-padded tap blocks,
        # bias in the column that multiplies the kernel's all-ones scratch row.
        wp = jnp.transpose(w, (3, 0, 1, 2)).reshape(cout, K * K, cin)
        wp = jnp.pad(wp, ((0, 0), (0, 0), (0, CPAD - cin)))
        wp = wp.at[:, 0, cin].set(b)
        return wp.reshape(cout, K * K * CPAD).astype(jnp.float32)

    w1p = pack_weight(w1, b1)
    w2p = pack_weight(w2, b2)

    kernel = partial(resblock_kernel, W=W, K=K, res_scale=res_scale)

    flops = int(2 * 2 * cout * L * K * K * CPAD)              # two fused convs
    bytes_accessed = int(4 * (x2d.size + masks.size + w1p.size + w2p.size
                              + cout * L))

    out2d = pl.pallas_call(
        kernel,
        out_shape=jax.ShapeDtypeStruct((cout, L), x_nchw.dtype),
        grid_spec=pltpu.PrefetchScalarGridSpec(
            num_scalar_prefetch=0,
            grid=(1,),                       # whole batch in one grid step
            in_specs=[
                pl.BlockSpec((cin, L), lambda i: (0, 0)),
                pl.BlockSpec((K * K, cin, L), lambda i: (0, 0, 0)),
                pl.BlockSpec((cout, K * K * CPAD), lambda i: (0, 0)),
                pl.BlockSpec((cout, K * K * CPAD), lambda i: (0, 0)),
            ],
            out_specs=pl.BlockSpec((cout, L), lambda i: (0, 0)),
            scratch_shapes=[pltpu.VMEM((K * K * CPAD, L), jnp.float32)],
        ),
        compiler_params=pltpu.CompilerParams(
            dimension_semantics=("arbitrary",)),
        cost_estimate=pl.CostEstimate(
            flops=flops, transcendentals=0, bytes_accessed=bytes_accessed),
    )(x2d, masks, w1p, w2p)

    return jnp.transpose(out2d.reshape(cout, N, H, W), (1, 0, 2, 3))


def _reference_resblock(x_nchw, w1, b1, w2, b2, res_scale):
    """Plain-JAX reference (same math as the PyTorch module)."""
    dn = ("NHWC", "HWIO", "NHWC")
    x = jnp.transpose(x_nchw, (0, 2, 3, 1))
    y = jax.lax.conv_general_dilated(x, w1, (1, 1), "SAME", dimension_numbers=dn) + b1
    y = jnp.maximum(y, 0.0)
    r = jax.lax.conv_general_dilated(y, w2, (1, 1), "SAME", dimension_numbers=dn) + b2
    out = r * res_scale + x
    return jnp.transpose(out, (0, 3, 1, 2))


if __name__ == "__main__":
    # ResBlock(conv=default_conv, in_feat=4, n_feat=4, kernel_size=3,
    #          bias=True, bn=False, act=ReLU, res_scale=0.5)
    N, C, H, W, K = 2, 4, 16, 16, 3
    res_scale = 0.5

    key = jax.random.PRNGKey(0)
    k_x, k_w1, k_b1, k_w2, k_b2 = jax.random.split(key, 5)

    x = jax.random.normal(k_x, (N, C, H, W), jnp.float32)
    fan_in = C * K * K
    w1 = jax.random.normal(k_w1, (K, K, C, C), jnp.float32) / jnp.sqrt(fan_in)
    b1 = jax.random.normal(k_b1, (C,), jnp.float32) * 0.1
    w2 = jax.random.normal(k_w2, (K, K, C, C), jnp.float32) / jnp.sqrt(fan_in)
    b2 = jax.random.normal(k_b2, (C,), jnp.float32) * 0.1

    out = resblock_forward(x, w1, b1, w2, b2, res_scale=res_scale)
    out = jax.block_until_ready(out)

    ref = _reference_resblock(x, w1, b1, w2, b2, res_scale)
    assert out.shape == (N, C, H, W)
    assert jnp.allclose(out, ref, atol=1e-4, rtol=1e-4), "mismatch vs reference"

    print("KERNEL_OK")
</pallas_src>

<mosaic_0001>
module attributes {stable_mosaic.version = 11 : i64} {
  func.func @resblock_kernel(%arg0: i32, %arg1: memref<4x512xf32, #tpu.memory_space<vmem>>, %arg2: memref<9x4x512xf32, #tpu.memory_space<vmem>>, %arg3: memref<4x72xf32, #tpu.memory_space<vmem>>, %arg4: memref<4x72xf32, #tpu.memory_space<vmem>>, %arg5: memref<4x512xf32, #tpu.memory_space<vmem>>, %arg6: memref<72x512xf32, #tpu.memory_space<vmem>>) attributes {dimension_semantics = [#tpu.dimension_semantics<arbitrary>], iteration_bounds = array<i64: 1>, scalar_prefetch = 0 : i64, scratch_operands = 1 : i64, tpu.core_type = #tpu.core_type<tc>, window_params = [{pipeline_mode = #tpu.pipeline_mode<synchronous>, transform_indices = @transform_0, window_bounds = array<i64: 4, 512>}, {pipeline_mode = #tpu.pipeline_mode<synchronous>, transform_indices = @transform_1, window_bounds = array<i64: 9, 4, 512>}, {pipeline_mode = #tpu.pipeline_mode<synchronous>, transform_indices = @transform_2, window_bounds = array<i64: 4, 72>}, {pipeline_mode = #tpu.pipeline_mode<synchronous>, transform_indices = @transform_3, window_bounds = array<i64: 4, 72>}, {pipeline_mode = #tpu.pipeline_mode<synchronous>, transform_indices = @transform_4, window_bounds = array<i64: 4, 512>}]} {
    %cst = arith.constant 0.000000e+00 : f32
    %0 = vector.broadcast %cst : f32 to vector<72x512xf32>
    %c0 = arith.constant 0 : index
    %c0_0 = arith.constant 0 : index
    %1 = vector.load %arg6[%c0, %c0_0] : memref<72x512xf32, #tpu.memory_space<vmem>>, vector<72x512xf32>
    tpu.vector_store %arg6[%c0, %c0_0], %0 {strides = array<i32>} : memref<72x512xf32, #tpu.memory_space<vmem>>, vector<72x512xf32>,
    %cst_1 = arith.constant 1.000000e+00 : f32
    %2 = vector.broadcast %cst_1 : f32 to vector<1x512xf32>
    %c4 = arith.constant 4 : index
    %c0_2 = arith.constant 0 : index
    %3 = vector.load %arg6[%c4, %c0_2] : memref<72x512xf32, #tpu.memory_space<vmem>>, vector<1x512xf32>
    tpu.vector_store %arg6[%c4, %c0_2], %2 {strides = array<i32>} : memref<72x512xf32, #tpu.memory_space<vmem>>, vector<1x512xf32>,
    %c0_3 = arith.constant 0 : index
    %c0_4 = arith.constant 0 : index
    %4 = vector.load %arg1[%c0_3, %c0_4] : memref<4x512xf32, #tpu.memory_space<vmem>>, vector<4x512xf32>
    %c17_i32 = arith.constant 17 : i32
    %5 = tpu.dynamic_rotate %4 by %c17_i32 dim 1 : vector<4x512xf32>, i32 -> vector<4x512xf32>
    %c0_5 = arith.constant 0 : index
    %c0_6 = arith.constant 0 : index
    %c0_7 = arith.constant 0 : index
    %6 = vector.load %arg2[%c0_5, %c0_6, %c0_7] : memref<9x4x512xf32, #tpu.memory_space<vmem>>, vector<1x4x512xf32>
    %7 = vector.shape_cast %6 : vector<1x4x512xf32> to vector<4x512xf32>
    %8 = arith.mulf %5, %7 : vector<4x512xf32>
    %c0_8 = arith.constant 0 : index
    %c0_9 = arith.constant 0 : index
    %9 = vector.load %arg6[%c0_8, %c0_9] : memref<72x512xf32, #tpu.memory_space<vmem>>, vector<4x512xf32>
    tpu.vector_store %arg6[%c0_8, %c0_9], %8 {strides = array<i32>} : memref<72x512xf32, #tpu.memory_space<vmem>>, vector<4x512xf32>,
    %c16_i32 = arith.constant 16 : i32
    %10 = tpu.dynamic_rotate %4 by %c16_i32 dim 1 : vector<4x512xf32>, i32 -> vector<4x512xf32>
    %c1 = arith.constant 1 : index
    %c0_10 = arith.constant 0 : index
    %c0_11 = arith.constant 0 : index
    %11 = vector.load %arg2[%c1, %c0_10, %c0_11] : memref<9x4x512xf32, #tpu.memory_space<vmem>>, vector<1x4x512xf32>
    %12 = vector.shape_cast %11 : vector<1x4x512xf32> to vector<4x512xf32>
    %13 = arith.mulf %10, %12 : vector<4x512xf32>
    %c8 = arith.constant 8 : index
    %c0_12 = arith.constant 0 : index
    %14 = vector.load %arg6[%c8, %c0_12] : memref<72x512xf32, #tpu.memory_space<vmem>>, vector<4x512xf32>
    tpu.vector_store %arg6[%c8, %c0_12], %13 {strides = array<i32>} : memref<72x512xf32, #tpu.memory_space<vmem>>, vector<4x512xf32>,
    %c15_i32 = arith.constant 15 : i32
    %15 = tpu.dynamic_rotate %4 by %c15_i32 dim 1 : vector<4x512xf32>, i32 -> vector<4x512xf32>
    %c2 = arith.constant 2 : index
    %c0_13 = arith.constant 0 : index
    %c0_14 = arith.constant 0 : index
    %16 = vector.load %arg2[%c2, %c0_13, %c0_14] : memref<9x4x512xf32, #tpu.memory_space<vmem>>, vector<1x4x512xf32>
    %17 = vector.shape_cast %16 : vector<1x4x512xf32> to vector<4x512xf32>
    %18 = arith.mulf %15, %17 : vector<4x512xf32>
    %c16 = arith.constant 16 : index
    %c0_15 = arith.constant 0 : index
    %19 = vector.load %arg6[%c16, %c0_15] : memref<72x512xf32, #tpu.memory_space<vmem>>, vector<4x512xf32>
    tpu.vector_store %arg6[%c16, %c0_15], %18 {strides = array<i32>} : memref<72x512xf32, #tpu.memory_space<vmem>>, vector<4x512xf32>,
    %c1_i32 = arith.constant 1 : i32
    %20 = tpu.dynamic_rotate %4 by %c1_i32 dim 1 : vector<4x512xf32>, i32 -> vector<4x512xf32>
    %c3 = arith.constant 3 : index
    %c0_16 = arith.constant 0 : index
    %c0_17 = arith.constant 0 : index
    %21 = vector.load %arg2[%c3, %c0_16, %c0_17] : memref<9x4x512xf32, #tpu.memory_space<vmem>>, vector<1x4x512xf32>
    %22 = vector.shape_cast %21 : vector<1x4x512xf32> to vector<4x512xf32>
    %23 = arith.mulf %20, %22 : vector<4x512xf32>
    %c24 = arith.constant 24 : index
    %c0_18 = arith.constant 0 : index
    %24 = vector.load %arg6[%c24, %c0_18] : memref<72x512xf32, #tpu.memory_space<vmem>>, vector<4x512xf32>
    tpu.vector_store %arg6[%c24, %c0_18], %23 {strides = array<i32>} : memref<72x512xf32, #tpu.memory_space<vmem>>, vector<4x512xf32>,
    %c32 = arith.constant 32 : index
    %c0_19 = arith.constant 0 : index
    %25 = vector.load %arg6[%c32, %c0_19] : memref<72x512xf32, #tpu.memory_space<vmem>>, vector<4x512xf32>
    tpu.vector_store %arg6[%c32, %c0_19], %4 {strides = array<i32>} : memref<72x512xf32, #tpu.memory_space<vmem>>, vector<4x512xf32>,
    %c511_i32 = arith.constant 511 : i32
    %26 = tpu.dynamic_rotate %4 by %c511_i32 dim 1 : vector<4x512xf32>, i32 -> vector<4x512xf32>
    %c5 = arith.constant 5 : index
    %c0_20 = arith.constant 0 : index
    %c0_21 = arith.constant 0 : index
    %27 = vector.load %arg2[%c5, %c0_20, %c0_21] : memref<9x4x512xf32, #tpu.memory_space<vmem>>, vector<1x4x512xf32>
    %28 = vector.shape_cast %27 : vector<1x4x512xf32> to vector<4x512xf32>
    %29 = arith.mulf %26, %28 : vector<4x512xf32>
    %c40 = arith.constant 40 : index
    %c0_22 = arith.constant 0 : index
    %30 = vector.load %arg6[%c40, %c0_22] : memref<72x512xf32, #tpu.memory_space<vmem>>, vector<4x512xf32>
    tpu.vector_store %arg6[%c40, %c0_22], %29 {strides = array<i32>} : memref<72x512xf32, #tpu.memory_space<vmem>>, vector<4x512xf32>,
    %c497_i32 = arith.constant 497 : i32
    %31 = tpu.dynamic_rotate %4 by %c497_i32 dim 1 : vector<4x512xf32>, i32 -> vector<4x512xf32>
    %c6 = arith.constant 6 : index
    %c0_23 = arith.constant 0 : index
    %c0_24 = arith.constant 0 : index
    %32 = vector.load %arg2[%c6, %c0_23, %c0_24] : memref<9x4x512xf32, #tpu.memory_space<vmem>>, vector<1x4x512xf32>
    %33 = vector.shape_cast %32 : vector<1x4x512xf32> to vector<4x512xf32>
    %34 = arith.mulf %31, %33 : vector<4x512xf32>
    %c48 = arith.constant 48 : index
    %c0_25 = arith.constant 0 : index
    %35 = vector.load %arg6[%c48, %c0_25] : memref<72x512xf32, #tpu.memory_space<vmem>>, vector<4x512xf32>
    tpu.vector_store %arg6[%c48, %c0_25], %34 {strides = array<i32>} : memref<72x512xf32, #tpu.memory_space<vmem>>, vector<4x512xf32>,
    %c496_i32 = arith.constant 496 : i32
    %36 = tpu.dynamic_rotate %4 by %c496_i32 dim 1 : vector<4x512xf32>, i32 -> vector<4x512xf32>
    %c7 = arith.constant 7 : index
    %c0_26 = arith.constant 0 : index
    %c0_27 = arith.constant 0 : index
    %37 = vector.load %arg2[%c7, %c0_26, %c0_27] : memref<9x4x512xf32, #tpu.memory_space<vmem>>, vector<1x4x512xf32>
    %38 = vector.shape_cast %37 : vector<1x4x512xf32> to vector<4x512xf32>
    %39 = arith.mulf %36, %38 : vector<4x512xf32>
    %c56 = arith.constant 56 : index
    %c0_28 = arith.constant 0 : index
    %40 = vector.load %arg6[%c56, %c0_28] : memref<72x512xf32, #tpu.memory_space<vmem>>, vector<4x512xf32>
    tpu.vector_store %arg6[%c56, %c0_28], %39 {strides = array<i32>} : memref<72x512xf32, #tpu.memory_space<vmem>>, vector<4x512xf32>,
    %c495_i32 = arith.constant 495 : i32
    %41 = tpu.dynamic_rotate %4 by %c495_i32 dim 1 : vector<4x512xf32>, i32 -> vector<4x512xf32>
    %c8_29 = arith.constant 8 : index
    %c0_30 = arith.constant 0 : index
    %c0_31 = arith.constant 0 : index
    %42 = vector.load %arg2[%c8_29, %c0_30, %c0_31] : memref<9x4x512xf32, #tpu.memory_space<vmem>>, vector<1x4x512xf32>
    %43 = vector.shape_cast %42 : vector<1x4x512xf32> to vector<4x512xf32>
    %44 = arith.mulf %41, %43 : vector<4x512xf32>
    %c64 = arith.constant 64 : index
    %c0_32 = arith.constant 0 : index
    %45 = vector.load %arg6[%c64, %c0_32] : memref<72x512xf32, #tpu.memory_space<vmem>>, vector<4x512xf32>
    tpu.vector_store %arg6[%c64, %c0_32], %44 {strides = array<i32>} : memref<72x512xf32, #tpu.memory_space<vmem>>, vector<4x512xf32>,
    %c0_33 = arith.constant 0 : index
    %c0_34 = arith.constant 0 : index
    %46 = vector.load %arg3[%c0_33, %c0_34] : memref<4x72xf32, #tpu.memory_space<vmem>>, vector<4x72xf32>
    %c0_35 = arith.constant 0 : index
    %c0_36 = arith.constant 0 : index
    %47 = vector.load %arg6[%c0_35, %c0_36] : memref<72x512xf32, #tpu.memory_space<vmem>>, vector<72x512xf32>
    %cst_37 = arith.constant dense<0.000000e+00> : vector<4x512xf32>
    %48 = tpu.matmul %46, %47, %cst_37 {dimension_numbers = #tpu.dot_dimension_numbers<[1], [0], [0], [1], [0, 0, 1, 1], [], []>} : vector<4x72xf32>, vector<72x512xf32>, vector<4x512xf32> -> vector<4x512xf32>
    %cst_38 = arith.constant 0.000000e+00 : f32
    %49 = vector.broadcast %cst_38 : f32 to vector<4x512xf32>
    %50 = arith.maximumf %48, %49 : vector<4x512xf32>
    %c17_i32_39 = arith.constant 17 : i32
    %51 = tpu.dynamic_rotate %50 by %c17_i32_39 dim 1 : vector<4x512xf32>, i32 -> vector<4x512xf32>
    %c0_40 = arith.constant 0 : index
    %c0_41 = arith.constant 0 : index
    %c0_42 = arith.constant 0 : index
    %52 = vector.load %arg2[%c0_40, %c0_41, %c0_42] : memref<9x4x512xf32, #tpu.memory_space<vmem>>, vector<1x4x512xf32>
    %53 = vector.shape_cast %52 : vector<1x4x512xf32> to vector<4x512xf32>
    %54 = arith.mulf %51, %53 : vector<4x512xf32>
    %c0_43 = arith.constant 0 : index
    %c0_44 = arith.constant 0 : index
    %55 = vector.load %arg6[%c0_43, %c0_44] : memref<72x512xf32, #tpu.memory_space<vmem>>, vector<4x512xf32>
    tpu.vector_store %arg6[%c0_43, %c0_44], %54 {strides = array<i32>} : memref<72x512xf32, #tpu.memory_space<vmem>>, vector<4x512xf32>,
    %c16_i32_45 = arith.constant 16 : i32
    %56 = tpu.dynamic_rotate %50 by %c16_i32_45 dim 1 : vector<4x512xf32>, i32 -> vector<4x512xf32>
    %c1_46 = arith.constant 1 : index
    %c0_47 = arith.constant 0 : index
    %c0_48 = arith.constant 0 : index
    %57 = vector.load %arg2[%c1_46, %c0_47, %c0_48] : memref<9x4x512xf32, #tpu.memory_space<vmem>>, vector<1x4x512xf32>
    %58 = vector.shape_cast %57 : vector<1x4x512xf32> to vector<4x512xf32>
    %59 = arith.mulf %56, %58 : vector<4x512xf32>
    %c8_49 = arith.constant 8 : index
    %c0_50 = arith.constant 0 : index
    %60 = vector.load %arg6[%c8_49, %c0_50] : memref<72x512xf32, #tpu.memory_space<vmem>>, vector<4x512xf32>
    tpu.vector_store %arg6[%c8_49, %c0_50], %59 {strides = array<i32>} : memref<72x512xf32, #tpu.memory_space<vmem>>, vector<4x512xf32>,
    %c15_i32_51 = arith.constant 15 : i32
    %61 = tpu.dynamic_rotate %50 by %c15_i32_51 dim 1 : vector<4x512xf32>, i32 -> vector<4x512xf32>
    %c2_52 = arith.constant 2 : index
    %c0_53 = arith.constant 0 : index
    %c0_54 = arith.constant 0 : index
    %62 = vector.load %arg2[%c2_52, %c0_53, %c0_54] : memref<9x4x512xf32, #tpu.memory_space<vmem>>, vector<1x4x512xf32>
    %63 = vector.shape_cast %62 : vector<1x4x512xf32> to vector<4x512xf32>
    %64 = arith.mulf %61, %63 : vector<4x512xf32>
    %c16_55 = arith.constant 16 : index
    %c0_56 = arith.constant 0 : index
    %65 = vector.load %arg6[%c16_55, %c0_56] : memref<72x512xf32, #tpu.memory_space<vmem>>, vector<4x512xf32>
    tpu.vector_store %arg6[%c16_55, %c0_56], %64 {strides = array<i32>} : memref<72x512xf32, #tpu.memory_space<vmem>>, vector<4x512xf32>,
    %c1_i32_57 = arith.constant 1 : i32
    %66 = tpu.dynamic_rotate %50 by %c1_i32_57 dim 1 : vector<4x512xf32>, i32 -> vector<4x512xf32>
    %c3_58 = arith.constant 3 : index
    %c0_59 = arith.constant 0 : index
    %c0_60 = arith.constant 0 : index
    %67 = vector.load %arg2[%c3_58, %c0_59, %c0_60] : memref<9x4x512xf32, #tpu.memory_space<vmem>>, vector<1x4x512xf32>
    %68 = vector.shape_cast %67 : vector<1x4x512xf32> to vector<4x512xf32>
    %69 = arith.mulf %66, %68 : vector<4x512xf32>
    %c24_61 = arith.constant 24 : index
    %c0_62 = arith.constant 0 : index
    %70 = vector.load %arg6[%c24_61, %c0_62] : memref<72x512xf32, #tpu.memory_space<vmem>>, vector<4x512xf32>
    tpu.vector_store %arg6[%c24_61, %c0_62], %69 {strides = array<i32>} : memref<72x512xf32, #tpu.memory_space<vmem>>, vector<4x512xf32>,
    %c32_63 = arith.constant 32 : index
    %c0_64 = arith.constant 0 : index
    %71 = vector.load %arg6[%c32_63, %c0_64] : memref<72x512xf32, #tpu.memory_space<vmem>>, vector<4x512xf32>
    tpu.vector_store %arg6[%c32_63, %c0_64], %50 {strides = array<i32>} : memref<72x512xf32, #tpu.memory_space<vmem>>, vector<4x512xf32>,
    %c511_i32_65 = arith.constant 511 : i32
    %72 = tpu.dynamic_rotate %50 by %c511_i32_65 dim 1 : vector<4x512xf32>, i32 -> vector<4x512xf32>
    %c5_66 = arith.constant 5 : index
    %c0_67 = arith.constant 0 : index
    %c0_68 = arith.constant 0 : index
    %73 = vector.load %arg2[%c5_66, %c0_67, %c0_68] : memref<9x4x512xf32, #tpu.memory_space<vmem>>, vector<1x4x512xf32>
    %74 = vector.shape_cast %73 : vector<1x4x512xf32> to vector<4x512xf32>
    %75 = arith.mulf %72, %74 : vector<4x512xf32>
    %c40_69 = arith.constant 40 : index
    %c0_70 = arith.constant 0 : index
    %76 = vector.load %arg6[%c40_69, %c0_70] : memref<72x512xf32, #tpu.memory_space<vmem>>, vector<4x512xf32>
    tpu.vector_store %arg6[%c40_69, %c0_70], %75 {strides = array<i32>} : memref<72x512xf32, #tpu.memory_space<vmem>>, vector<4x512xf32>,
    %c497_i32_71 = arith.constant 497 : i32
    %77 = tpu.dynamic_rotate %50 by %c497_i32_71 dim 1 : vector<4x512xf32>, i32 -> vector<4x512xf32>
    %c6_72 = arith.constant 6 : index
    %c0_73 = arith.constant 0 : index
    %c0_74 = arith.constant 0 : index
    %78 = vector.load %arg2[%c6_72, %c0_73, %c0_74] : memref<9x4x512xf32, #tpu.memory_space<vmem>>, vector<1x4x512xf32>
    %79 = vector.shape_cast %78 : vector<1x4x512xf32> to vector<4x512xf32>
    %80 = arith.mulf %77, %79 : vector<4x512xf32>
    %c48_75 = arith.constant 48 : index
    %c0_76 = arith.constant 0 : index
    %81 = vector.load %arg6[%c48_75, %c0_76] : memref<72x512xf32, #tpu.memory_space<vmem>>, vector<4x512xf32>
    tpu.vector_store %arg6[%c48_75, %c0_76], %80 {strides = array<i32>} : memref<72x512xf32, #tpu.memory_space<vmem>>, vector<4x512xf32>,
    %c496_i32_77 = arith.constant 496 : i32
    %82 = tpu.dynamic_rotate %50 by %c496_i32_77 dim 1 : vector<4x512xf32>, i32 -> vector<4x512xf32>
    %c7_78 = arith.constant 7 : index
    %c0_79 = arith.constant 0 : index
    %c0_80 = arith.constant 0 : index
    %83 = vector.load %arg2[%c7_78, %c0_79, %c0_80] : memref<9x4x512xf32, #tpu.memory_space<vmem>>, vector<1x4x512xf32>
    %84 = vector.shape_cast %83 : vector<1x4x512xf32> to vector<4x512xf32>
    %85 = arith.mulf %82, %84 : vector<4x512xf32>
    %c56_81 = arith.constant 56 : index
    %c0_82 = arith.constant 0 : index
    %86 = vector.load %arg6[%c56_81, %c0_82] : memref<72x512xf32, #tpu.memory_space<vmem>>, vector<4x512xf32>
    tpu.vector_store %arg6[%c56_81, %c0_82], %85 {strides = array<i32>} : memref<72x512xf32, #tpu.memory_space<vmem>>, vector<4x512xf32>,
    %c495_i32_83 = arith.constant 495 : i32
    %87 = tpu.dynamic_rotate %50 by %c495_i32_83 dim 1 : vector<4x512xf32>, i32 -> vector<4x512xf32>
    %c8_84 = arith.constant 8 : index
    %c0_85 = arith.constant 0 : index
    %c0_86 = arith.constant 0 : index
    %88 = vector.load %arg2[%c8_84, %c0_85, %c0_86] : memref<9x4x512xf32, #tpu.memory_space<vmem>>, vector<1x4x512xf32>
    %89 = vector.shape_cast %88 : vector<1x4x512xf32> to vector<4x512xf32>
    %90 = arith.mulf %87, %89 : vector<4x512xf32>
    %c64_87 = arith.constant 64 : index
    %c0_88 = arith.constant 0 : index
    %91 = vector.load %arg6[%c64_87, %c0_88] : memref<72x512xf32, #tpu.memory_space<vmem>>, vector<4x512xf32>
    tpu.vector_store %arg6[%c64_87, %c0_88], %90 {strides = array<i32>} : memref<72x512xf32, #tpu.memory_space<vmem>>, vector<4x512xf32>,
    %c0_89 = arith.constant 0 : index
    %c0_90 = arith.constant 0 : index
    %92 = vector.load %arg4[%c0_89, %c0_90] : memref<4x72xf32, #tpu.memory_space<vmem>>, vector<4x72xf32>
    %c0_91 = arith.constant 0 : index
    %c0_92 = arith.constant 0 : index
    %93 = vector.load %arg6[%c0_91, %c0_92] : memref<72x512xf32, #tpu.memory_space<vmem>>, vector<72x512xf32>
    %cst_93 = arith.constant dense<0.000000e+00> : vector<4x512xf32>
    %94 = tpu.matmul %92, %93, %cst_93 {dimension_numbers = #tpu.dot_dimension_numbers<[1], [0], [0], [1], [0, 0, 1, 1], [], []>} : vector<4x72xf32>, vector<72x512xf32>, vector<4x512xf32> -> vector<4x512xf32>
    %cst_94 = arith.constant 5.000000e-01 : f32
    %95 = vector.broadcast %cst_94 : f32 to vector<4x512xf32>
    %96 = arith.mulf %94, %95 : vector<4x512xf32>
    %97 = arith.addf %96, %4 : vector<4x512xf32>
    %c0_95 = arith.constant 0 : index
    %c0_96 = arith.constant 0 : index
    %98 = vector.load %arg5[%c0_95, %c0_96] : memref<4x512xf32, #tpu.memory_space<vmem>>, vector<4x512xf32>
    tpu.vector_store %arg5[%c0_95, %c0_96], %97 {strides = array<i32>} : memref<4x512xf32, #tpu.memory_space<vmem>>, vector<4x512xf32>,
    return
  }
  func.func @transform_0(%arg0: i32) -> (i32, i32) {
    %c0_i32 = arith.constant 0 : i32
    %c0_i32_0 = arith.constant 0 : i32
    %c0_i32_1 = arith.constant 0 : i32
    return %c0_i32, %c0_i32_0 : i32, i32
  }
  func.func @transform_1(%arg0: i32) -> (i32, i32, i32) {
    %c0_i32 = arith.constant 0 : i32
    %c0_i32_0 = arith.constant 0 : i32
    %c0_i32_1 = arith.constant 0 : i32
    %c0_i32_2 = arith.constant 0 : i32
    return %c0_i32, %c0_i32_0, %c0_i32_1 : i32, i32, i32
  }
  func.func @transform_2(%arg0: i32) -> (i32, i32) {
    %c0_i32 = arith.constant 0 : i32
    %c0_i32_0 = arith.constant 0 : i32
    %c0_i32_1 = arith.constant 0 : i32
    return %c0_i32, %c0_i32_0 : i32, i32
  }
  func.func @transform_3(%arg0: i32) -> (i32, i32) {
    %c0_i32 = arith.constant 0 : i32
    %c0_i32_0 = arith.constant 0 : i32
    %c0_i32_1 = arith.constant 0 : i32
    return %c0_i32, %c0_i32_0 : i32, i32
  }
  func.func @transform_4(%arg0: i32) -> (i32, i32) {
    %c0_i32 = arith.constant 0 : i32
    %c0_i32_0 = arith.constant 0 : i32
    %c0_i32_1 = arith.constant 0 : i32
    return %c0_i32, %c0_i32_0 : i32, i32
  }
}

</mosaic_0001>

<llo_original>
// kernel: tpu_custom_call.1
$region0: #{tpu_custom_call.1}
  #allocation0 [shape = 'u32[]', space=smem, size = 0x4, offset = 0x4, fixed_abs, tag = 'smem constant byte address 0x4 - core index']
  #allocation1 [shape = 'u32[72,128]{1,0:T(1,128)}', space=vmem, size = 0x9000, scoped, tag = 'internal scratch']
  #allocation2 [shape = 'f32[72,512]{1,0:T(8,128)}', space=vmem, size = 0x24000, scoped, tag = 'scratch operand']
  %s0 = inlined_call_operand.hbm [shape: f32[4,512], index: 0, kind: input, shape index: {}]
  %s1 = inlined_call_operand.hbm [shape: f32[9,4,512], index: 1, kind: input, shape index: {}]
  %s2 = inlined_call_operand.hbm [shape: f32[4,72], index: 2, kind: input, shape index: {}]
  %s3 = inlined_call_operand.hbm [shape: f32[4,72], index: 3, kind: input, shape index: {}]
  %s4 = inlined_call_operand.hbm [shape: f32[4,512], index: 4, kind: output, shape index: {}]
  %s5 = sld [smem:[#allocation0]]
  $region42: #{tpu_custom_call.1} parent=0
    _
  %s7 = ssub.s32 1, %s5
  %s8 = scalar_select 0, %s7, %s5
  $region1: #{tpu_custom_call.1} parent=0
    #allocation3 [shape = 'u8[8192]{0}', space=vmem, size = 0x2000, scoped, tag = 'input window, operand 0, single buffered']
    #allocation4 [shape = 's32[1]{0}', space=sflag, size = 0x4, scoped, tag = 'scoped memory for tpu_custom_call.1']
    #allocation5 [shape = 's32[1]{0}', space=sflag, size = 0x4, scoped, tag = 'scoped memory for tpu_custom_call.1']
    #allocation6 [shape = 'u8[73728]{0}', space=vmem, size = 0x12000, scoped, tag = 'input window, operand 1, single buffered']
    #allocation7 [shape = 's32[1]{0}', space=sflag, size = 0x4, scoped, tag = 'scoped memory for tpu_custom_call.1']
    #allocation8 [shape = 'u8[2048]{0}', space=vmem, size = 0x800, scoped, tag = 'input window, operand 2, single buffered']
    #allocation9 [shape = 'u8[2048]{0}', space=vmem, size = 0x800, scoped, tag = 'input window, operand 3, single buffered']
    #allocation10 [shape = 's32[1]{0}', space=sflag, size = 0x4, scoped, tag = 'scoped memory for tpu_custom_call.1']
    #allocation11 [shape = 'u8[8192]{0}', space=vmem, size = 0x2000, scoped, tag = 'output window, operand 0, single buffered']
    %9 = vsyncpa [#allocation4], 0
    %10 = vsyncpa [#allocation7], 0
    %11 = vsyncpa [#allocation10], 0
    %12 = vsyncpa [#allocation5], 0
    // Predicated region
    $region2: #{tpu_custom_call.1} parent=1 // pred_check
      _
    $region3: #{tpu_custom_call.1} parent=1 // pred_check_branch
      %14 = sbr.rel (0) target = $region5
    $region4: #{tpu_custom_call.1} parent=1 // pred_region
      %16 = vsyncadd [#allocation4], 0
      %s18 = sshll.u32 %s0, 4
      %s19 = int_to_ptr.hbm [resolvable:$true] %s18
      %s20 = sshll.u32 [#allocation3], 4
      %s21 = int_to_ptr.vmem [resolvable:$true] %s20
      %23 = dma.hbm_to_vmem [thread:$0]  %s19, 256, %s21, [#allocation4]
    $region5: #{tpu_custom_call.1} parent=1 // pred_fallthru
      _
    // Predicated region
    $region6: #{tpu_custom_call.1} parent=1 // pred_check
      _
    $region7: #{tpu_custom_call.1} parent=1 // pred_check_branch
      %25 = sbr.rel (0) target = $region9
    $region8: #{tpu_custom_call.1} parent=1 // pred_region
      %27 = vsyncadd [#allocation7], 0
      %s28 = sshll.u32 %s1, 4
      %s29 = int_to_ptr.hbm [resolvable:$true] %s28
      %s30 = sshll.u32 [#allocation6], 4
      %s31 = int_to_ptr.vmem [resolvable:$true] %s30
      %36 = dma.hbm_to_vmem [thread:$0]  %s29, 2304, %s31, [#allocation7], 256, 256, 16
    $region9: #{tpu_custom_call.1} parent=1 // pred_fallthru
      _
    // Predicated region
    $region10: #{tpu_custom_call.1} parent=1 // pred_check
      _
    $region11: #{tpu_custom_call.1} parent=1 // pred_check_branch
      %38 = sbr.rel (0) target = $region13
    $region12: #{tpu_custom_call.1} parent=1 // pred_region
      %40 = vsyncadd [#allocation7], 0
      %s42 = sshll.u32 %s2, 4
      %s43 = int_to_ptr.hbm [resolvable:$true] %s42
      %s44 = sshll.u32 [#allocation8], 4
      %s45 = int_to_ptr.vmem [resolvable:$true] %s44
      %47 = dma.hbm_to_vmem [thread:$0]  %s43, 64, %s45, [#allocation7]
    $region13: #{tpu_custom_call.1} parent=1 // pred_fallthru
      _
    // Predicated region
    $region14: #{tpu_custom_call.1} parent=1 // pred_check
      _
    $region15: #{tpu_custom_call.1} parent=1 // pred_check_branch
      %49 = sbr.rel (0) target = $region17
    $region16: #{tpu_custom_call.1} parent=1 // pred_region
      %51 = vsyncadd [#allocation10], 0
      %s53 = sshll.u32 %s3, 4
      %s54 = int_to_ptr.hbm [resolvable:$true] %s53
      %s55 = sshll.u32 [#allocation9], 4
      %s56 = int_to_ptr.vmem [resolvable:$true] %s55
      %58 = dma.hbm_to_vmem [thread:$0]  %s54, 64, %s56, [#allocation10]
    $region17: #{tpu_custom_call.1} parent=1 // pred_fallthru
      _
    // Predicated region
    $region18: #{tpu_custom_call.1} parent=1 // pred_check
      _
    $region19: #{tpu_custom_call.1} parent=1 // pred_check_branch
      %60 = sbr.rel (0) target = $region21
    $region20: #{tpu_custom_call.1} parent=1 // pred_region
      %62 = dma.done [#allocation4], 256
    $region21: #{tpu_custom_call.1} parent=1 // pred_fallthru
      _
    // Predicated region
    $region22: #{tpu_custom_call.1} parent=1 // pred_check
      _
    $region23: #{tpu_custom_call.1} parent=1 // pred_check_branch
      %64 = sbr.rel (0) target = $region25
    $region24: #{tpu_custom_call.1} parent=1 // pred_region
      %66 = dma.done [#allocation7], 2304
    $region25: #{tpu_custom_call.1} parent=1 // pred_fallthru
      _
    // Predicated region
    $region26: #{tpu_custom_call.1} parent=1 // pred_check
      _
    $region27: #{tpu_custom_call.1} parent=1 // pred_check_branch
      %68 = sbr.rel (0) target = $region29
    $region28: #{tpu_custom_call.1} parent=1 // pred_region
      %70 = dma.done [#allocation7], 64
    $region29: #{tpu_custom_call.1} parent=1 // pred_fallthru
      _
    // Predicated region
    $region30: #{tpu_custom_call.1} parent=1 // pred_check
      _
    $region31: #{tpu_custom_call.1} parent=1 // pred_check_branch
      %72 = sbr.rel (0) target = $region33
    $region32: #{tpu_custom_call.1} parent=1 // pred_region
      %74 = dma.done [#allocation10], 64
    $region33: #{tpu_custom_call.1} parent=1 // pred_fallthru
      _
    %75 = vst [vmem:[#allocation2] sm:$0xff] 0.0
    %76 = vst [vmem:[#allocation2 + $0x8] sm:$0xff] 0.0
    %77 = vst [vmem:[#allocation2 + $0x10] sm:$0xff] 0.0
    %78 = vst [vmem:[#allocation2 + $0x18] sm:$0xff] 0.0
    %79 = vst [vmem:[#allocation2 + $0x20] sm:$0xff] 0.0
    %80 = vst [vmem:[#allocation2 + $0x28] sm:$0xff] 0.0
    %81 = vst [vmem:[#allocation2 + $0x30] sm:$0xff] 0.0
    %82 = vst [vmem:[#allocation2 + $0x38] sm:$0xff] 0.0
    %83 = vst [vmem:[#allocation2 + $0x40] sm:$0xff] 0.0
    %84 = vst [vmem:[#allocation2 + $0x48] sm:$0xff] 0.0
    %85 = vst [vmem:[#allocation2 + $0x50] sm:$0xff] 0.0
    %86 = vst [vmem:[#allocation2 + $0x58] sm:$0xff] 0.0
    %87 = vst [vmem:[#allocation2 + $0x60] sm:$0xff] 0.0
    %88 = vst [vmem:[#allocation2 + $0x68] sm:$0xff] 0.0
    %89 = vst [vmem:[#allocation2 + $0x70] sm:$0xff] 0.0
    %90 = vst [vmem:[#allocation2 + $0x78] sm:$0xff] 0.0
    %91 = vst [vmem:[#allocation2 + $0x80] sm:$0xff] 0.0
    %92 = vst [vmem:[#allocation2 + $0x88] sm:$0xff] 0.0
    %93 = vst [vmem:[#allocation2 + $0x90] sm:$0xff] 0.0
    %94 = vst [vmem:[#allocation2 + $0x98] sm:$0xff] 0.0
    %95 = vst [vmem:[#allocation2 + $0xa0] sm:$0xff] 0.0
    %96 = vst [vmem:[#allocation2 + $0xa8] sm:$0xff] 0.0
    %97 = vst [vmem:[#allocation2 + $0xb0] sm:$0xff] 0.0
    %98 = vst [vmem:[#allocation2 + $0xb8] sm:$0xff] 0.0
    %99 = vst [vmem:[#allocation2 + $0xc0] sm:$0xff] 0.0
    %100 = vst [vmem:[#allocation2 + $0xc8] sm:$0xff] 0.0
    %101 = vst [vmem:[#allocation2 + $0xd0] sm:$0xff] 0.0
    %102 = vst [vmem:[#allocation2 + $0xd8] sm:$0xff] 0.0
    %103 = vst [vmem:[#allocation2 + $0xe0] sm:$0xff] 0.0
    %104 = vst [vmem:[#allocation2 + $0xe8] sm:$0xff] 0.0
    %105 = vst [vmem:[#allocation2 + $0xf0] sm:$0xff] 0.0
    %106 = vst [vmem:[#allocation2 + $0xf8] sm:$0xff] 0.0
    %107 = vst [vmem:[#allocation2 + $0x100] sm:$0xff] 0.0
    %108 = vst [vmem:[#allocation2 + $0x108] sm:$0xff] 0.0
    %109 = vst [vmem:[#allocation2 + $0x110] sm:$0xff] 0.0
    %110 = vst [vmem:[#allocation2 + $0x118] sm:$0xff] 0.0
    %v111 = vlaneseq
    %vm112 = vcmp.ge.s32.totalorder %v111, 0
    %vm113 = vcmp.lt.s32.totalorder %v111, 512
    %vm114 = vmand %vm112, %vm113
    %s115 = scalar_lea.vmem [#allocation2], 4
    %116 = vst.msk [vmem:[%s115] ss:$8 sm:$0xf] %vm114, 1.0
    %117 = vst.msk [vmem:[%s115] ss:$8 sm:$0x0] %vm114, 1.0
    %v118 = vld [vmem:[#allocation3] sm:$0xff]
    %v119 = vld [vmem:[#allocation3 + $0x8] sm:$0xff]
    %122 = vst [vmem:[#allocation1] ss:$2 sm:$0xff] %v118
    %s123 = scalar_lea.vmem [#allocation1], 16
    %124 = vst [vmem:[%s123] ss:$2 sm:$0xff] %v119
    %v125 = vld.sshfl [vmem:[#allocation1] sm:$0xff pattern:$0x75316420]
    %v126 = vld.sshfl [vmem:[#allocation1 + $0x8] sm:$0xff pattern:$0x75316420]
    %v127 = vld.sshfl [vmem:[#allocation1 + $0x10] sm:$0xff pattern:$0x75316420]
    %v128 = vld.sshfl [vmem:[#allocation1 + $0x18] sm:$0xff pattern:$0x75316420]
    %133 = vrot.lane.b32.xlu0 %v125, 17
    %v134 = vpop.permute.xlu0 %133
    %135 = vrot.lane.b32.xlu0 %v126, 17
    %v136 = vpop.permute.xlu0 %135
    %137 = vrot.lane.b32.xlu0 %v127, 17
    %v138 = vpop.permute.xlu0 %137
    %139 = vrot.lane.b32.xlu0 %v128, 17
    %v140 = vpop.permute.xlu0 %139
    %v141 = vlaneseq
    %v142 = vand.u32 %v141, 127
    %vm143 = vcmp.lt.s32.totalorder %v142, 17
    %v144 = vsel %vm143, %v138, %v140
    %v145 = vsel %vm143, %v136, %v138
    %v146 = vsel %vm143, %v134, %v136
    %v147 = vsel %vm143, %v140, %v134
    %v148 = vld [vmem:[#allocation6] sm:$0xff]
    %v149 = vld [vmem:[#allocation6 + $0x8] sm:$0xff]
    %152 = vst [vmem:[#allocation1] ss:$2 sm:$0xff] %v148
    %s153 = scalar_lea.vmem [#allocation1], 16
    %154 = vst [vmem:[%s153] ss:$2 sm:$0xff] %v149
    %v155 = vld.sshfl [vmem:[#allocation1] sm:$0xff pattern:$0x75316420]
    %v156 = vld.sshfl [vmem:[#allocation1 + $0x8] sm:$0xff pattern:$0x75316420]
    %v157 = vld.sshfl [vmem:[#allocation1 + $0x10] sm:$0xff pattern:$0x75316420]
    %v158 = vld.sshfl [vmem:[#allocation1 + $0x18] sm:$0xff pattern:$0x75316420]
    %v163 = vmul.f32 %v147, %v155
    %v164 = vmul.f32 %v146, %v156
    %v165 = vmul.f32 %v145, %v157
    %v166 = vmul.f32 %v144, %v158
    %167 = vst [vmem:[#allocation2] sm:$0xf] %v163
    %168 = vst [vmem:[#allocation2 + $0x8] sm:$0xf] %v164
    %169 = vst [vmem:[#allocation2 + $0x10] sm:$0xf] %v165
    %170 = vst [vmem:[#allocation2 + $0x18] sm:$0xf] %v166
    %171 = vst [vmem:[#allocation1] ss:$2 sm:$0xff] %v118
    %s172 = scalar_lea.vmem [#allocation1], 16
    %173 = vst [vmem:[%s172] ss:$2 sm:$0xff] %v119
    %v174 = vld.sshfl [vmem:[#allocation1] sm:$0xff pattern:$0x75316420]
    %v175 = vld.sshfl [vmem:[#allocation1 + $0x8] sm:$0xff pattern:$0x75316420]
    %v176 = vld.sshfl [vmem:[#allocation1 + $0x10] sm:$0xff pattern:$0x75316420]
    %v177 = vld.sshfl [vmem:[#allocation1 + $0x18] sm:$0xff pattern:$0x75316420]
    %182 = vrot.lane.b32.xlu0 %v174, 16
    %v183 = vpop.permute.xlu0 %182
    %184 = vrot.lane.b32.xlu0 %v175, 16
    %v185 = vpop.permute.xlu0 %184
    %186 = vrot.lane.b32.xlu0 %v176, 16
    %v187 = vpop.permute.xlu0 %186
    %188 = vrot.lane.b32.xlu0 %v177, 16
    %v189 = vpop.permute.xlu0 %188
    %vm190 = vcmp.lt.s32.totalorder %v142, 16
    %v191 = vsel %vm190, %v187, %v189
    %v192 = vsel %vm190, %v185, %v187
    %v193 = vsel %vm190, %v183, %v185
    %v194 = vsel %vm190, %v189, %v183
    %s195 = scalar_lea.vmem [#allocation6], 16
    %v196 = vld [vmem:[%s195] sm:$0xff]
    %v197 = vld [vmem:[%s195 + $0x8] sm:$0xff]
    %200 = vst [vmem:[#allocation1] ss:$2 sm:$0xff] %v196
    %s201 = scalar_lea.vmem [#allocation1], 16
    %202 = vst [vmem:[%s201] ss:$2 sm:$0xff] %v197
    %v203 = vld.sshfl [vmem:[#allocation1] sm:$0xff pattern:$0x75316420]
    %v204 = vld.sshfl [vmem:[#allocation1 + $0x8] sm:$0xff pattern:$0x75316420]
    %v205 = vld.sshfl [vmem:[#allocation1 + $0x10] sm:$0xff pattern:$0x75316420]
    %v206 = vld.sshfl [vmem:[#allocation1 + $0x18] sm:$0xff pattern:$0x75316420]
    %v211 = vmul.f32 %v194, %v203
    %v212 = vmul.f32 %v193, %v204
    %v213 = vmul.f32 %v192, %v205
    %v214 = vmul.f32 %v191, %v206
    %215 = vst [vmem:[#allocation2 + $0x20] sm:$0xf] %v211
    %216 = vst [vmem:[#allocation2 + $0x28] sm:$0xf] %v212
    %217 = vst [vmem:[#allocation2 + $0x30] sm:$0xf] %v213
    %218 = vst [vmem:[#allocation2 + $0x38] sm:$0xf] %v214
    %219 = vst [vmem:[#allocation1] ss:$2 sm:$0xff] %v118
    %s220 = scalar_lea.vmem [#allocation1], 16
    %221 = vst [vmem:[%s220] ss:$2 sm:$0xff] %v119
    %v222 = vld.sshfl [vmem:[#allocation1] sm:$0xff pattern:$0x75316420]
    %v223 = vld.sshfl [vmem:[#allocation1 + $0x8] sm:$0xff pattern:$0x75316420]
    %v224 = vld.sshfl [vmem:[#allocation1 + $0x10] sm:$0xff pattern:$0x75316420]
    %v225 = vld.sshfl [vmem:[#allocation1 + $0x18] sm:$0xff pattern:$0x75316420]
    %230 = vrot.lane.b32.xlu0 %v222, 15
    %v231 = vpop.permute.xlu0 %230
    %232 = vrot.lane.b32.xlu0 %v223, 15
    %v233 = vpop.permute.xlu0 %232
    %234 = vrot.lane.b32.xlu0 %v224, 15
    %v235 = vpop.permute.xlu0 %234
    %236 = vrot.lane.b32.xlu0 %v225, 15
    %v237 = vpop.permute.xlu0 %236
    %vm238 = vcmp.lt.s32.totalorder %v142, 15
    %v239 = vsel %vm238, %v235, %v237
    %v240 = vsel %vm238, %v233, %v235
    %v241 = vsel %vm238, %v231, %v233
    %v242 = vsel %vm238, %v237, %v231
    %s243 = scalar_lea.vmem [#allocation6], 32
    %v244 = vld [vmem:[%s243] sm:$0xff]
    %v245 = vld [vmem:[%s243 + $0x8] sm:$0xff]
    %248 = vst [vmem:[#allocation1] ss:$2 sm:$0xff] %v244
    %s249 = scalar_lea.vmem [#allocation1], 16
    %250 = vst [vmem:[%s249] ss:$2 sm:$0xff] %v245
    %v251 = vld.sshfl [vmem:[#allocation1] sm:$0xff pattern:$0x75316420]
    %v252 = vld.sshfl [vmem:[#allocation1 + $0x8] sm:$0xff pattern:$0x75316420]
    %v253 = vld.sshfl [vmem:[#allocation1 + $0x10] sm:$0xff pattern:$0x75316420]
    %v254 = vld.sshfl [vmem:[#allocation1 + $0x18] sm:$0xff pattern:$0x75316420]
    %v259 = vmul.f32 %v242, %v251
    %v260 = vmul.f32 %v241, %v252
    %v261 = vmul.f32 %v240, %v253
    %v262 = vmul.f32 %v239, %v254
    %263 = vst [vmem:[#allocation2 + $0x40] sm:$0xf] %v259
    %264 = vst [vmem:[#allocation2 + $0x48] sm:$0xf] %v260
    %265 = vst [vmem:[#allocation2 + $0x50] sm:$0xf] %v261
    %266 = vst [vmem:[#allocation2 + $0x58] sm:$0xf] %v262
    %267 = vst [vmem:[#allocation1] ss:$2 sm:$0xff] %v118
    %s268 = scalar_lea.vmem [#allocation1], 16
    %269 = vst [vmem:[%s268] ss:$2 sm:$0xff] %v119
    %v270 = vld.sshfl [vmem:[#allocation1] sm:$0xff pattern:$0x75316420]
    %v271 = vld.sshfl [vmem:[#allocation1 + $0x8] sm:$0xff pattern:$0x75316420]
    %v272 = vld.sshfl [vmem:[#allocation1 + $0x10] sm:$0xff pattern:$0x75316420]
    %v273 = vld.sshfl [vmem:[#allocation1 + $0x18] sm:$0xff pattern:$0x75316420]
    %278 = vrot.lane.b32.xlu0 %v270, 1
    %v279 = vpop.permute.xlu0 %278
    %280 = vrot.lane.b32.xlu0 %v271, 1
    %v281 = vpop.permute.xlu0 %280
    %282 = vrot.lane.b32.xlu0 %v272, 1
    %v283 = vpop.permute.xlu0 %282
    %284 = vrot.lane.b32.xlu0 %v273, 1
    %v285 = vpop.permute.xlu0 %284
    %vm286 = vcmp.lt.s32.totalorder %v142, 1
    %v287 = vsel %vm286, %v283, %v285
    %v288 = vsel %vm286, %v281, %v283
    %v289 = vsel %vm286, %v279, %v281
    %v290 = vsel %vm286, %v285, %v279
    %s291 = scalar_lea.vmem [#allocation6], 48
    %v292 = vld [vmem:[%s291] sm:$0xff]
    %v293 = vld [vmem:[%s291 + $0x8] sm:$0xff]
    %296 = vst [vmem:[#allocation1] ss:$2 sm:$0xff] %v292
    %s297 = scalar_lea.vmem [#allocation1], 16
    %298 = vst [vmem:[%s297] ss:$2 sm:$0xff] %v293
    %v299 = vld.sshfl [vmem:[#allocation1] sm:$0xff pattern:$0x75316420]
    %v300 = vld.sshfl [vmem:[#allocation1 + $0x8] sm:$0xff pattern:$0x75316420]
    %v301 = vld.sshfl [vmem:[#allocation1 + $0x10] sm:$0xff pattern:$0x75316420]
    %v302 = vld.sshfl [vmem:[#allocation1 + $0x18] sm:$0xff pattern:$0x75316420]
    %v307 = vmul.f32 %v290, %v299
    %v308 = vmul.f32 %v289, %v300
    %v309 = vmul.f32 %v288, %v301
    %v310 = vmul.f32 %v287, %v302
    %311 = vst [vmem:[#allocation2 + $0x60] sm:$0xf] %v307
    %312 = vst [vmem:[#allocation2 + $0x68] sm:$0xf] %v308
    %313 = vst [vmem:[#allocation2 + $0x70] sm:$0xf] %v309
    %314 = vst [vmem:[#allocation2 + $0x78] sm:$0xf] %v310
    %315 = vst [vmem:[#allocation1] ss:$2 sm:$0xff] %v118
    %s316 = scalar_lea.vmem [#allocation1], 16
    %317 = vst [vmem:[%s316] ss:$2 sm:$0xff] %v119
    %v318 = vld.sshfl [vmem:[#allocation1] sm:$0xff pattern:$0x75316420]
    %v319 = vld.sshfl [vmem:[#allocation1 + $0x8] sm:$0xff pattern:$0x75316420]
    %v320 = vld.sshfl [vmem:[#allocation1 + $0x10] sm:$0xff pattern:$0x75316420]
    %v321 = vld.sshfl [vmem:[#allocation1 + $0x18] sm:$0xff pattern:$0x75316420]
    %326 = vst [vmem:[#allocation2 + $0x80] sm:$0xf] %v318
    %327 = vst [vmem:[#allocation2 + $0x88] sm:$0xf] %v319
    %328 = vst [vmem:[#allocation2 + $0x90] sm:$0xf] %v320
    %329 = vst [vmem:[#allocation2 + $0x98] sm:$0xf] %v321
    %330 = vst [vmem:[#allocation1] ss:$2 sm:$0xff] %v118
    %s331 = scalar_lea.vmem [#allocation1], 16
    %332 = vst [vmem:[%s331] ss:$2 sm:$0xff] %v119
    %v333 = vld.sshfl [vmem:[#allocation1] sm:$0xff pattern:$0x75316420]
    %v334 = vld.sshfl [vmem:[#allocation1 + $0x8] sm:$0xff pattern:$0x75316420]
    %v335 = vld.sshfl [vmem:[#allocation1 + $0x10] sm:$0xff pattern:$0x75316420]
    %v336 = vld.sshfl [vmem:[#allocation1 + $0x18] sm:$0xff pattern:$0x75316420]
    %341 = vrot.lane.b32.xlu0 %v333, 127
    %v342 = vpop.permute.xlu0 %341
    %343 = vrot.lane.b32.xlu0 %v334, 127
    %v344 = vpop.permute.xlu0 %343
    %345 = vrot.lane.b32.xlu0 %v335, 127
    %v346 = vpop.permute.xlu0 %345
    %347 = vrot.lane.b32.xlu0 %v336, 127
    %v348 = vpop.permute.xlu0 %347
    %vm349 = vcmp.lt.s32.totalorder %v142, 127
    %v350 = vsel %vm349, %v346, %v348
    %v351 = vsel %vm349, %v344, %v346
    %v352 = vsel %vm349, %v342, %v344
    %v353 = vsel %vm349, %v348, %v342
    %s354 = scalar_lea.vmem [#allocation6], 80
    %v355 = vld [vmem:[%s354] sm:$0xff]
    %v356 = vld [vmem:[%s354 + $0x8] sm:$0xff]
    %359 = vst [vmem:[#allocation1] ss:$2 sm:$0xff] %v355
    %s360 = scalar_lea.vmem [#allocation1], 16
    %361 = vst [vmem:[%s360] ss:$2 sm:$0xff] %v356
    %v362 = vld.sshfl [vmem:[#allocation1] sm:$0xff pattern:$0x75316420]
    %v363 = vld.sshfl [vmem:[#allocation1 + $0x8] sm:$0xff pattern:$0x75316420]
    %v364 = vld.sshfl [vmem:[#allocation1 + $0x10] sm:$0xff pattern:$0x75316420]
    %v365 = vld.sshfl [vmem:[#allocation1 + $0x18] sm:$0xff pattern:$0x75316420]
    %v370 = vmul.f32 %v352, %v362
    %v371 = vmul.f32 %v351, %v363
    %v372 = vmul.f32 %v350, %v364
    %v373 = vmul.f32 %v353, %v365
    %374 = vst [vmem:[#allocation2 + $0xa0] sm:$0xf] %v370
    %375 = vst [vmem:[#allocation2 + $0xa8] sm:$0xf] %v371
    %376 = vst [vmem:[#allocation2 + $0xb0] sm:$0xf] %v372
    %377 = vst [vmem:[#allocation2 + $0xb8] sm:$0xf] %v373
    %378 = vst [vmem:[#allocation1] ss:$2 sm:$0xff] %v118
    %s379 = scalar_lea.vmem [#allocation1], 16
    %380 = vst [vmem:[%s379] ss:$2 sm:$0xff] %v119
    %v381 = vld.sshfl [vmem:[#allocation1] sm:$0xff pattern:$0x75316420]
    %v382 = vld.sshfl [vmem:[#allocation1 + $0x8] sm:$0xff pattern:$0x75316420]
    %v383 = vld.sshfl [vmem:[#allocation1 + $0x10] sm:$0xff pattern:$0x75316420]
    %v384 = vld.sshfl [vmem:[#allocation1 + $0x18] sm:$0xff pattern:$0x75316420]
    %389 = vrot.lane.b32.xlu0 %v381, 113
    %v390 = vpop.permute.xlu0 %389
    %391 = vrot.lane.b32.xlu0 %v382, 113
    %v392 = vpop.permute.xlu0 %391
    %393 = vrot.lane.b32.xlu0 %v383, 113
    %v394 = vpop.permute.xlu0 %393
    %395 = vrot.lane.b32.xlu0 %v384, 113
    %v396 = vpop.permute.xlu0 %395
    %vm397 = vcmp.lt.s32.totalorder %v142, 113
    %v398 = vsel %vm397, %v394, %v396
    %v399 = vsel %vm397, %v392, %v394
    %v400 = vsel %vm397, %v390, %v392
    %v401 = vsel %vm397, %v396, %v390
    %s402 = scalar_lea.vmem [#allocation6], 96
    %v403 = vld [vmem:[%s402] sm:$0xff]
    %v404 = vld [vmem:[%s402 + $0x8] sm:$0xff]
    %407 = vst [vmem:[#allocation1] ss:$2 sm:$0xff] %v403
    %s408 = scalar_lea.vmem [#allocation1], 16
    %409 = vst [vmem:[%s408] ss:$2 sm:$0xff] %v404
    %v410 = vld.sshfl [vmem:[#allocation1] sm:$0xff pattern:$0x75316420]
    %v411 = vld.sshfl [vmem:[#allocation1 + $0x8] sm:$0xff pattern:$0x75316420]
    %v412 = vld.sshfl [vmem:[#allocation1 + $0x10] sm:$0xff pattern:$0x75316420]
    %v413 = vld.sshfl [vmem:[#allocation1 + $0x18] sm:$0xff pattern:$0x75316420]
    %v418 = vmul.f32 %v400, %v410
    %v419 = vmul.f32 %v399, %v411
    %v420 = vmul.f32 %v398, %v412
    %v421 = vmul.f32 %v401, %v413
    %422 = vst [vmem:[#allocation2 + $0xc0] sm:$0xf] %v418
    %423 = vst [vmem:[#allocation2 + $0xc8] sm:$0xf] %v419
    %424 = vst [vmem:[#allocation2 + $0xd0] sm:$0xf] %v420
    %425 = vst [vmem:[#allocation2 + $0xd8] sm:$0xf] %v421
    %426 = vst [vmem:[#allocation1] ss:$2 sm:$0xff] %v118
    %s427 = scalar_lea.vmem [#allocation1], 16
    %428 = vst [vmem:[%s427] ss:$2 sm:$0xff] %v119
    %v429 = vld.sshfl [vmem:[#allocation1] sm:$0xff pattern:$0x75316420]
    %v430 = vld.sshfl [vmem:[#allocation1 + $0x8] sm:$0xff pattern:$0x75316420]
    %v431 = vld.sshfl [vmem:[#allocation1 + $0x10] sm:$0xff pattern:$0x75316420]
    %v432 = vld.sshfl [vmem:[#allocation1 + $0x18] sm:$0xff pattern:$0x75316420]
    %437 = vrot.lane.b32.xlu0 %v429, 112
    %v438 = vpop.permute.xlu0 %437
    %439 = vrot.lane.b32.xlu0 %v430, 112
    %v440 = vpop.permute.xlu0 %439
    %441 = vrot.lane.b32.xlu0 %v431, 112
    %v442 = vpop.permute.xlu0 %441
    %443 = vrot.lane.b32.xlu0 %v432, 112
    %v444 = vpop.permute.xlu0 %443
    %vm445 = vcmp.lt.s32.totalorder %v142, 112
    %v446 = vsel %vm445, %v442, %v444
    %v447 = vsel %vm445, %v440, %v442
    %v448 = vsel %vm445, %v438, %v440
    %v449 = vsel %vm445, %v444, %v438
    %s450 = scalar_lea.vmem [#allocation6], 112
    %v451 = vld [vmem:[%s450] sm:$0xff]
    %v452 = vld [vmem:[%s450 + $0x8] sm:$0xff]
    %455 = vst [vmem:[#allocation1] ss:$2 sm:$0xff] %v451
    %s456 = scalar_lea.vmem [#allocation1], 16
    %457 = vst [vmem:[%s456] ss:$2 sm:$0xff] %v452
    %v458 = vld.sshfl [vmem:[#allocation1] sm:$0xff pattern:$0x75316420]
    %v459 = vld.sshfl [vmem:[#allocation1 + $0x8] sm:$0xff pattern:$0x75316420]
    %v460 = vld.sshfl [vmem:[#allocation1 + $0x10] sm:$0xff pattern:$0x75316420]
    %v461 = vld.sshfl [vmem:[#allocation1 + $0x18] sm:$0xff pattern:$0x75316420]
    %v466 = vmul.f32 %v448, %v458
    %v467 = vmul.f32 %v447, %v459
    %v468 = vmul.f32 %v446, %v460
    %v469 = vmul.f32 %v449, %v461
    %470 = vst [vmem:[#allocation2 + $0xe0] sm:$0xf] %v466
    %471 = vst [vmem:[#allocation2 + $0xe8] sm:$0xf] %v467
    %472 = vst [vmem:[#allocation2 + $0xf0] sm:$0xf] %v468
    %473 = vst [vmem:[#allocation2 + $0xf8] sm:$0xf] %v469
    %474 = vst [vmem:[#allocation1] ss:$2 sm:$0xff] %v118
    %s475 = scalar_lea.vmem [#allocation1], 16
    %476 = vst [vmem:[%s475] ss:$2 sm:$0xff] %v119
    %v477 = vld.sshfl [vmem:[#allocation1] sm:$0xff pattern:$0x75316420]
    %v478 = vld.sshfl [vmem:[#allocation1 + $0x8] sm:$0xff pattern:$0x75316420]
    %v479 = vld.sshfl [vmem:[#allocation1 + $0x10] sm:$0xff pattern:$0x75316420]
    %v480 = vld.sshfl [vmem:[#allocation1 + $0x18] sm:$0xff pattern:$0x75316420]
    %485 = vrot.lane.b32.xlu0 %v477, 111
    %v486 = vpop.permute.xlu0 %485
    %487 = vrot.lane.b32.xlu0 %v478, 111
    %v488 = vpop.permute.xlu0 %487
    %489 = vrot.lane.b32.xlu0 %v479, 111
    %v490 = vpop.permute.xlu0 %489
    %491 = vrot.lane.b32.xlu0 %v480, 111
    %v492 = vpop.permute.xlu0 %491
    %vm493 = vcmp.lt.s32.totalorder %v142, 111
    %v494 = vsel %vm493, %v490, %v492
    %v495 = vsel %vm493, %v488, %v490
    %v496 = vsel %vm493, %v486, %v488
    %v497 = vsel %vm493, %v492, %v486
    %s498 = scalar_lea.vmem [#allocation6], 128
    %v499 = vld [vmem:[%s498] sm:$0xff]
    %v500 = vld [vmem:[%s498 + $0x8] sm:$0xff]
    %503 = vst [vmem:[#allocation1] ss:$2 sm:$0xff] %v499
    %s504 = scalar_lea.vmem [#allocation1], 16
    %505 = vst [vmem:[%s504] ss:$2 sm:$0xff] %v500
    %v506 = vld.sshfl [vmem:[#allocation1] sm:$0xff pattern:$0x75316420]
    %v507 = vld.sshfl [vmem:[#allocation1 + $0x8] sm:$0xff pattern:$0x75316420]
    %v508 = vld.sshfl [vmem:[#allocation1 + $0x10] sm:$0xff pattern:$0x75316420]
    %v509 = vld.sshfl [vmem:[#allocation1 + $0x18] sm:$0xff pattern:$0x75316420]
    %v514 = vmul.f32 %v496, %v506
    %v515 = vmul.f32 %v495, %v507
    %v516 = vmul.f32 %v494, %v508
    %v517 = vmul.f32 %v497, %v509
    %518 = vst [vmem:[#allocation2 + $0x100] sm:$0xf] %v514
    %519 = vst [vmem:[#allocation2 + $0x108] sm:$0xf] %v515
    %520 = vst [vmem:[#allocation2 + $0x110] sm:$0xf] %v516
    %521 = vst [vmem:[#allocation2 + $0x118] sm:$0xf] %v517
    %v522 = vld [vmem:[#allocation8] sm:$0xf]
    %v523 = vld [vmem:[#allocation2] sm:$0xff]
    %v524 = vld [vmem:[#allocation2 + $0x8] sm:$0xff]
    %v525 = vld [vmem:[#allocation2 + $0x10] sm:$0xff]
    %v526 = vld [vmem:[#allocation2 + $0x18] sm:$0xff]
    %v527 = vld [vmem:[#allocation2 + $0x20] sm:$0xff]
    %v528 = vld [vmem:[#allocation2 + $0x28] sm:$0xff]
    %v529 = vld [vmem:[#allocation2 + $0x30] sm:$0xff]
    %v530 = vld [vmem:[#allocation2 + $0x38] sm:$0xff]
    %v531 = vld [vmem:[#allocation2 + $0x40] sm:$0xff]
    %v532 = vld [vmem:[#allocation2 + $0x48] sm:$0xff]
    %v533 = vld [vmem:[#allocation2 + $0x50] sm:$0xff]
    %v534 = vld [vmem:[#allocation2 + $0x58] sm:$0xff]
    %v535 = vld [vmem:[#allocation2 + $0x60] sm:$0xff]
    %v536 = vld [vmem:[#allocation2 + $0x68] sm:$0xff]
    %v537 = vld [vmem:[#allocation2 + $0x70] sm:$0xff]
    %v538 = vld [vmem:[#allocation2 + $0x78] sm:$0xff]
    %v539 = vld [vmem:[#allocation2 + $0x80] sm:$0xff]
    %v540 = vld [vmem:[#allocation2 + $0x88] sm:$0xff]
    %v541 = vld [vmem:[#allocation2 + $0x90] sm:$0xff]
    %v542 = vld [vmem:[#allocation2 + $0x98] sm:$0xff]
    %v543 = vld [vmem:[#allocation2 + $0xa0] sm:$0xff]
    %v544 = vld [vmem:[#allocation2 + $0xa8] sm:$0xff]
    %v545 = vld [vmem:[#allocation2 + $0xb0] sm:$0xff]
    %v546 = vld [vmem:[#allocation2 + $0xb8] sm:$0xff]
    %v547 = vld [vmem:[#allocation2 + $0xc0] sm:$0xff]
    %v548 = vld [vmem:[#allocation2 + $0xc8] sm:$0xff]
    %v549 = vld [vmem:[#allocation2 + $0xd0] sm:$0xff]
    %v550 = vld [vmem:[#allocation2 + $0xd8] sm:$0xff]
    %v551 = vld [vmem:[#allocation2 + $0xe0] sm:$0xff]
    %v552 = vld [vmem:[#allocation2 + $0xe8] sm:$0xff]
    %v553 = vld [vmem:[#allocation2 + $0xf0] sm:$0xff]
    %v554 = vld [vmem:[#allocation2 + $0xf8] sm:$0xff]
    %v555 = vld [vmem:[#allocation2 + $0x100] sm:$0xff]
    %v556 = vld [vmem:[#allocation2 + $0x108] sm:$0xff]
    %v557 = vld [vmem:[#allocation2 + $0x110] sm:$0xff]
    %v558 = vld [vmem:[#allocation2 + $0x118] sm:$0xff]
    %vm559 = vcmask 588800
    %v561 = vsel %vm559, %v522, 0
    %563 = vmatpush.msra.mxu0 0.0
    %564 = vmatpush.msra.mxu0 0.0
    %565 = vmatpush.msra.mxu0 0.0
    %566 = vmatpush.msra.mxu0 0.0
    %567 = vmatpush.msra.mxu0 0.0
    %568 = vmatpush.msra.mxu0 0.0
    %569 = vmatpush.msra.mxu0 0.0
    %570 = vmatpush.msra.mxu0 %v555
    %571 = vmatpush.msra.mxu0 %v551
    %572 = vmatpush.msra.mxu0 %v547
    %573 = vmatpush.msra.mxu0 %v543
    %574 = vmatpush.msra.mxu0 %v539
    %575 = vmatpush.msra.mxu0 %v535
    %576 = vmatpush.msra.mxu0 %v531
    %577 = vmatpush.msra.mxu0 %v527
    %578 = vmatpush.msra.mxu0 %v523
    %579 = vmatmul.f32.gmra.mxu0 %v561
    %v580 = vpop.f32.mrf.mxu0
    %v581 = vadd.f32 0.0, %v580
    %582 = vdwg.mxu0
    %583 = vmatpush.msra.mxu0 0.0
    %584 = vmatpush.msra.mxu0 0.0
    %585 = vmatpush.msra.mxu0 0.0
    %586 = vmatpush.msra.mxu0 0.0
    %587 = vmatpush.msra.mxu0 0.0
    %588 = vmatpush.msra.mxu0 0.0
    %589 = vmatpush.msra.mxu0 0.0
    %590 = vmatpush.msra.mxu0 %v556
    %591 = vmatpush.msra.mxu0 %v552
    %592 = vmatpush.msra.mxu0 %v548
    %593 = vmatpush.msra.mxu0 %v544
    %594 = vmatpush.msra.mxu0 %v540
    %595 = vmatpush.msra.mxu0 %v536
    %596 = vmatpush.msra.mxu0 %v532
    %597 = vmatpush.msra.mxu0 %v528
    %598 = vmatpush.msra.mxu0 %v524
    %599 = vmatmul.f32.gmra.mxu0 %v561
    %v600 = vpop.f32.mrf.mxu0
    %v601 = vadd.f32 0.0, %v600
    %602 = vdwg.mxu0
    %603 = vmatpush.msra.mxu0 0.0
    %604 = vmatpush.msra.mxu0 0.0
    %605 = vmatpush.msra.mxu0 0.0
    %606 = vmatpush.msra.mxu0 0.0
    %607 = vmatpush.msra.mxu0 0.0
    %608 = vmatpush.msra.mxu0 0.0
    %609 = vmatpush.msra.mxu0 0.0
    %610 = vmatpush.msra.mxu0 %v557
    %611 = vmatpush.msra.mxu0 %v553
    %612 = vmatpush.msra.mxu0 %v549
    %613 = vmatpush.msra.mxu0 %v545
    %614 = vmatpush.msra.mxu0 %v541
    %615 = vmatpush.msra.mxu0 %v537
    %616 = vmatpush.msra.mxu0 %v533
    %617 = vmatpush.msra.mxu0 %v529
    %618 = vmatpush.msra.mxu0 %v525
    %619 = vmatmul.f32.gmra.mxu0 %v561
    %v620 = vpop.f32.mrf.mxu0
    %v621 = vadd.f32 0.0, %v620
    %622 = vdwg.mxu0
    %623 = vmatpush.msra.mxu0 0.0
    %624 = vmatpush.msra.mxu0 0.0
    %625 = vmatpush.msra.mxu0 0.0
    %626 = vmatpush.msra.mxu0 0.0
    %627 = vmatpush.msra.mxu0 0.0
    %628 = vmatpush.msra.mxu0 0.0
    %629 = vmatpush.msra.mxu0 0.0
    %630 = vmatpush.msra.mxu0 %v558
    %631 = vmatpush.msra.mxu0 %v554
    %632 = vmatpush.msra.mxu0 %v550
    %633 = vmatpush.msra.mxu0 %v546
    %634 = vmatpush.msra.mxu0 %v542
    %635 = vmatpush.msra.mxu0 %v538
    %636 = vmatpush.msra.mxu0 %v534
    %637 = vmatpush.msra.mxu0 %v530
    %638 = vmatpush.msra.mxu0 %v526
    %639 = vmatmul.f32.gmra.mxu0 %v561
    %v640 = vpop.f32.mrf.mxu0
    %v641 = vadd.f32 0.0, %v640
    %642 = vdwg.mxu0
    %v643 = vmax.f32 %v581, 0.0
    %v644 = vmax.f32 %v601, 0.0
    %v645 = vmax.f32 %v621, 0.0
    %v646 = vmax.f32 %v641, 0.0
    %647 = vrot.lane.b32.xlu0 %v643, 17
    %v648 = vpop.permute.xlu0 %647
    %649 = vrot.lane.b32.xlu0 %v644, 17
    %v650 = vpop.permute.xlu0 %649
    %651 = vrot.lane.b32.xlu0 %v645, 17
    %v652 = vpop.permute.xlu0 %651
    %653 = vrot.lane.b32.xlu0 %v646, 17
    %v654 = vpop.permute.xlu0 %653
    %v655 = vsel %vm143, %v652, %v654
    %v656 = vsel %vm143, %v650, %v652
    %v657 = vsel %vm143, %v648, %v650
    %v658 = vsel %vm143, %v654, %v648
    %v659 = vld [vmem:[#allocation6] sm:$0xff]
    %v660 = vld [vmem:[#allocation6 + $0x8] sm:$0xff]
    %663 = vst [vmem:[#allocation1] ss:$2 sm:$0xff] %v659
    %s664 = scalar_lea.vmem [#allocation1], 16
    %665 = vst [vmem:[%s664] ss:$2 sm:$0xff] %v660
    %v666 = vld.sshfl [vmem:[#allocation1] sm:$0xff pattern:$0x75316420]
    %v667 = vld.sshfl [vmem:[#allocation1 + $0x8] sm:$0xff pattern:$0x75316420]
    %v668 = vld.sshfl [vmem:[#allocation1 + $0x10] sm:$0xff pattern:$0x75316420]
    %v669 = vld.sshfl [vmem:[#allocation1 + $0x18] sm:$0xff pattern:$0x75316420]
    %v674 = vmul.f32 %v658, %v666
    %v675 = vmul.f32 %v657, %v667
    %v676 = vmul.f32 %v656, %v668
    %v677 = vmul.f32 %v655, %v669
    %678 = vst [vmem:[#allocation2] sm:$0xf] %v674
    %679 = vst [vmem:[#allocation2 + $0x8] sm:$0xf] %v675
    %680 = vst [vmem:[#allocation2 + $0x10] sm:$0xf] %v676
    %681 = vst [vmem:[#allocation2 + $0x18] sm:$0xf] %v677
    %682 = vrot.lane.b32.xlu0 %v643, 16
    %v683 = vpop.permute.xlu0 %682
    %684 = vrot.lane.b32.xlu0 %v644, 16
    %v685 = vpop.permute.xlu0 %684
    %686 = vrot.lane.b32.xlu0 %v645, 16
    %v687 = vpop.permute.xlu0 %686
    %688 = vrot.lane.b32.xlu0 %v646, 16
    %v689 = vpop.permute.xlu0 %688
    %v690 = vsel %vm190, %v687, %v689
    %v691 = vsel %vm190, %v685, %v687
    %v692 = vsel %vm190, %v683, %v685
    %v693 = vsel %vm190, %v689, %v683
    %v694 = vld [vmem:[%s195] sm:$0xff]
    %v695 = vld [vmem:[%s195 + $0x8] sm:$0xff]
    %698 = vst [vmem:[#allocation1] ss:$2 sm:$0xff] %v694
    %s699 = scalar_lea.vmem [#allocation1], 16
    %700 = vst [vmem:[%s699] ss:$2 sm:$0xff] %v695
    %v701 = vld.sshfl [vmem:[#allocation1] sm:$0xff pattern:$0x75316420]
    %v702 = vld.sshfl [vmem:[#allocation1 + $0x8] sm:$0xff pattern:$0x75316420]
    %v703 = vld.sshfl [vmem:[#allocation1 + $0x10] sm:$0xff pattern:$0x75316420]
    %v704 = vld.sshfl [vmem:[#allocation1 + $0x18] sm:$0xff pattern:$0x75316420]
    %v709 = vmul.f32 %v693, %v701
    %v710 = vmul.f32 %v692, %v702
    %v711 = vmul.f32 %v691, %v703
    %v712 = vmul.f32 %v690, %v704
    %713 = vst [vmem:[#allocation2 + $0x20] sm:$0xf] %v709
    %714 = vst [vmem:[#allocation2 + $0x28] sm:$0xf] %v710
    %715 = vst [vmem:[#allocation2 + $0x30] sm:$0xf] %v711
    %716 = vst [vmem:[#allocation2 + $0x38] sm:$0xf] %v712
    %717 = vrot.lane.b32.xlu0 %v643, 15
    %v718 = vpop.permute.xlu0 %717
    %719 = vrot.lane.b32.xlu0 %v644, 15
    %v720 = vpop.permute.xlu0 %719
    %721 = vrot.lane.b32.xlu0 %v645, 15
    %v722 = vpop.permute.xlu0 %721
    %723 = vrot.lane.b32.xlu0 %v646, 15
    %v724 = vpop.permute.xlu0 %723
    %v725 = vsel %vm238, %v722, %v724
    %v726 = vsel %vm238, %v720, %v722
    %v727 = vsel %vm238, %v718, %v720
    %v728 = vsel %vm238, %v724, %v718
    %v729 = vld [vmem:[%s243] sm:$0xff]
    %v730 = vld [vmem:[%s243 + $0x8] sm:$0xff]
    %733 = vst [vmem:[#allocation1] ss:$2 sm:$0xff] %v729
    %s734 = scalar_lea.vmem [#allocation1], 16
    %735 = vst [vmem:[%s734] ss:$2 sm:$0xff] %v730
    %v736 = vld.sshfl [vmem:[#allocation1] sm:$0xff pattern:$0x75316420]
    %v737 = vld.sshfl [vmem:[#allocation1 + $0x8] sm:$0xff pattern:$0x75316420]
    %v738 = vld.sshfl [vmem:[#allocation1 + $0x10] sm:$0xff pattern:$0x75316420]
    %v739 = vld.sshfl [vmem:[#allocation1 + $0x18] sm:$0xff pattern:$0x75316420]
    %v744 = vmul.f32 %v728, %v736
    %v745 = vmul.f32 %v727, %v737
    %v746 = vmul.f32 %v726, %v738
    %v747 = vmul.f32 %v725, %v739
    %748 = vst [vmem:[#allocation2 + $0x40] sm:$0xf] %v744
    %749 = vst [vmem:[#allocation2 + $0x48] sm:$0xf] %v745
    %750 = vst [vmem:[#allocation2 + $0x50] sm:$0xf] %v746
    %751 = vst [vmem:[#allocation2 + $0x58] sm:$0xf] %v747
    %752 = vrot.lane.b32.xlu0 %v643, 1
    %v753 = vpop.permute.xlu0 %752
    %754 = vrot.lane.b32.xlu0 %v644, 1
    %v755 = vpop.permute.xlu0 %754
    %756 = vrot.lane.b32.xlu0 %v645, 1
    %v757 = vpop.permute.xlu0 %756
    %758 = vrot.lane.b32.xlu0 %v646, 1
    %v759 = vpop.permute.xlu0 %758
    %v760 = vsel %vm286, %v757, %v759
    %v761 = vsel %vm286, %v755, %v757
    %v762 = vsel %vm286, %v753, %v755
    %v763 = vsel %vm286, %v759, %v753
    %v764 = vld [vmem:[%s291] sm:$0xff]
    %v765 = vld [vmem:[%s291 + $0x8] sm:$0xff]
    %768 = vst [vmem:[#allocation1] ss:$2 sm:$0xff] %v764
    %s769 = scalar_lea.vmem [#allocation1], 16
    %770 = vst [vmem:[%s769] ss:$2 sm:$0xff] %v765
    %v771 = vld.sshfl [vmem:[#allocation1] sm:$0xff pattern:$0x75316420]
    %v772 = vld.sshfl [vmem:[#allocation1 + $0x8] sm:$0xff pattern:$0x75316420]
    %v773 = vld.sshfl [vmem:[#allocation1 + $0x10] sm:$0xff pattern:$0x75316420]
    %v774 = vld.sshfl [vmem:[#allocation1 + $0x18] sm:$0xff pattern:$0x75316420]
    %v779 = vmul.f32 %v763, %v771
    %v780 = vmul.f32 %v762, %v772
    %v781 = vmul.f32 %v761, %v773
    %v782 = vmul.f32 %v760, %v774
    %783 = vst [vmem:[#allocation2 + $0x60] sm:$0xf] %v779
    %784 = vst [vmem:[#allocation2 + $0x68] sm:$0xf] %v780
    %785 = vst [vmem:[#allocation2 + $0x70] sm:$0xf] %v781
    %786 = vst [vmem:[#allocation2 + $0x78] sm:$0xf] %v782
    %787 = vst [vmem:[#allocation2 + $0x80] sm:$0xf] %v643
    %788 = vst [vmem:[#allocation2 + $0x88] sm:$0xf] %v644
    %789 = vst [vmem:[#allocation2 + $0x90] sm:$0xf] %v645
    %790 = vst [vmem:[#allocation2 + $0x98] sm:$0xf] %v646
    %791 = vrot.lane.b32.xlu0 %v643, 127
    %v792 = vpop.permute.xlu0 %791
    %793 = vrot.lane.b32.xlu0 %v644, 127
    %v794 = vpop.permute.xlu0 %793
    %795 = vrot.lane.b32.xlu0 %v645, 127
    %v796 = vpop.permute.xlu0 %795
    %797 = vrot.lane.b32.xlu0 %v646, 127
    %v798 = vpop.permute.xlu0 %797
    %v799 = vsel %vm349, %v796, %v798
    %v800 = vsel %vm349, %v794, %v796
    %v801 = vsel %vm349, %v792, %v794
    %v802 = vsel %vm349, %v798, %v792
    %v803 = vld [vmem:[%s354] sm:$0xff]
    %v804 = vld [vmem:[%s354 + $0x8] sm:$0xff]
    %807 = vst [vmem:[#allocation1] ss:$2 sm:$0xff] %v803
    %s808 = scalar_lea.vmem [#allocation1], 16
    %809 = vst [vmem:[%s808] ss:$2 sm:$0xff] %v804
    %v810 = vld.sshfl [vmem:[#allocation1] sm:$0xff pattern:$0x75316420]
    %v811 = vld.sshfl [vmem:[#allocation1 + $0x8] sm:$0xff pattern:$0x75316420]
    %v812 = vld.sshfl [vmem:[#allocation1 + $0x10] sm:$0xff pattern:$0x75316420]
    %v813 = vld.sshfl [vmem:[#allocation1 + $0x18] sm:$0xff pattern:$0x75316420]
    %v818 = vmul.f32 %v801, %v810
    %v819 = vmul.f32 %v800, %v811
    %v820 = vmul.f32 %v799, %v812
    %v821 = vmul.f32 %v802, %v813
    %822 = vst [vmem:[#allocation2 + $0xa0] sm:$0xf] %v818
    %823 = vst [vmem:[#allocation2 + $0xa8] sm:$0xf] %v819
    %824 = vst [vmem:[#allocation2 + $0xb0] sm:$0xf] %v820
    %825 = vst [vmem:[#allocation2 + $0xb8] sm:$0xf] %v821
    %826 = vrot.lane.b32.xlu0 %v643, 113
    %v827 = vpop.permute.xlu0 %826
    %828 = vrot.lane.b32.xlu0 %v644, 113
    %v829 = vpop.permute.xlu0 %828
    %830 = vrot.lane.b32.xlu0 %v645, 113
    %v831 = vpop.permute.xlu0 %830
    %832 = vrot.lane.b32.xlu0 %v646, 113
    %v833 = vpop.permute.xlu0 %832
    %v834 = vsel %vm397, %v831, %v833
    %v835 = vsel %vm397, %v829, %v831
    %v836 = vsel %vm397, %v827, %v829
    %v837 = vsel %vm397, %v833, %v827
    %v838 = vld [vmem:[%s402] sm:$0xff]
    %v839 = vld [vmem:[%s402 + $0x8] sm:$0xff]
    %842 = vst [vmem:[#allocation1] ss:$2 sm:$0xff] %v838
    %s843 = scalar_lea.vmem [#allocation1], 16
    %844 = vst [vmem:[%s843] ss:$2 sm:$0xff] %v839
    %v845 = vld.sshfl [vmem:[#allocation1] sm:$0xff pattern:$0x75316420]
    %v846 = vld.sshfl [vmem:[#allocation1 + $0x8] sm:$0xff pattern:$0x75316420]
    %v847 = vld.sshfl [vmem:[#allocation1 + $0x10] sm:$0xff pattern:$0x75316420]
    %v848 = vld.sshfl [vmem:[#allocation1 + $0x18] sm:$0xff pattern:$0x75316420]
    %v853 = vmul.f32 %v836, %v845
    %v854 = vmul.f32 %v835, %v846
    %v855 = vmul.f32 %v834, %v847
    %v856 = vmul.f32 %v837, %v848
    %857 = vst [vmem:[#allocation2 + $0xc0] sm:$0xf] %v853
    %858 = vst [vmem:[#allocation2 + $0xc8] sm:$0xf] %v854
    %859 = vst [vmem:[#allocation2 + $0xd0] sm:$0xf] %v855
    %860 = vst [vmem:[#allocation2 + $0xd8] sm:$0xf] %v856
    %861 = vrot.lane.b32.xlu0 %v643, 112
    %v862 = vpop.permute.xlu0 %861
    %863 = vrot.lane.b32.xlu0 %v644, 112
    %v864 = vpop.permute.xlu0 %863
    %865 = vrot.lane.b32.xlu0 %v645, 112
    %v866 = vpop.permute.xlu0 %865
    %867 = vrot.lane.b32.xlu0 %v646, 112
    %v868 = vpop.permute.xlu0 %867
    %v869 = vsel %vm445, %v866, %v868
    %v870 = vsel %vm445, %v864, %v866
    %v871 = vsel %vm445, %v862, %v864
    %v872 = vsel %vm445, %v868, %v862
    %v873 = vld [vmem:[%s450] sm:$0xff]
    %v874 = vld [vmem:[%s450 + $0x8] sm:$0xff]
    %877 = vst [vmem:[#allocation1] ss:$2 sm:$0xff] %v873
    %s878 = scalar_lea.vmem [#allocation1], 16
    %879 = vst [vmem:[%s878] ss:$2 sm:$0xff] %v874
    %v880 = vld.sshfl [vmem:[#allocation1] sm:$0xff pattern:$0x75316420]
    %v881 = vld.sshfl [vmem:[#allocation1 + $0x8] sm:$0xff pattern:$0x75316420]
    %v882 = vld.sshfl [vmem:[#allocation1 + $0x10] sm:$0xff pattern:$0x75316420]
    %v883 = vld.sshfl [vmem:[#allocation1 + $0x18] sm:$0xff pattern:$0x75316420]
    %v888 = vmul.f32 %v871, %v880
    %v889 = vmul.f32 %v870, %v881
    %v890 = vmul.f32 %v869, %v882
    %v891 = vmul.f32 %v872, %v883
    %892 = vst [vmem:[#allocation2 + $0xe0] sm:$0xf] %v888
    %893 = vst [vmem:[#allocation2 + $0xe8] sm:$0xf] %v889
    %894 = vst [vmem:[#allocation2 + $0xf0] sm:$0xf] %v890
    %895 = vst [vmem:[#allocation2 + $0xf8] sm:$0xf] %v891
    %896 = vrot.lane.b32.xlu0 %v643, 111
    %v897 = vpop.permute.xlu0 %896
    %898 = vrot.lane.b32.xlu0 %v644, 111
    %v899 = vpop.permute.xlu0 %898
    %900 = vrot.lane.b32.xlu0 %v645, 111
    %v901 = vpop.permute.xlu0 %900
    %902 = vrot.lane.b32.xlu0 %v646, 111
    %v903 = vpop.permute.xlu0 %902
    %v904 = vsel %vm493, %v901, %v903
    %v905 = vsel %vm493, %v899, %v901
    %v906 = vsel %vm493, %v897, %v899
    %v907 = vsel %vm493, %v903, %v897
    %v908 = vld [vmem:[%s498] sm:$0xff]
    %v909 = vld [vmem:[%s498 + $0x8] sm:$0xff]
    %912 = vst [vmem:[#allocation1] ss:$2 sm:$0xff] %v908
    %s913 = scalar_lea.vmem [#allocation1], 16
    %914 = vst [vmem:[%s913] ss:$2 sm:$0xff] %v909
    %v915 = vld.sshfl [vmem:[#allocation1] sm:$0xff pattern:$0x75316420]
    %v916 = vld.sshfl [vmem:[#allocation1 + $0x8] sm:$0xff pattern:$0x75316420]
    %v917 = vld.sshfl [vmem:[#allocation1 + $0x10] sm:$0xff pattern:$0x75316420]
    %v918 = vld.sshfl [vmem:[#allocation1 + $0x18] sm:$0xff pattern:$0x75316420]
    %v923 = vmul.f32 %v906, %v915
    %v924 = vmul.f32 %v905, %v916
    %v925 = vmul.f32 %v904, %v917
    %v926 = vmul.f32 %v907, %v918
    %927 = vst [vmem:[#allocation2 + $0x100] sm:$0xf] %v923
    %928 = vst [vmem:[#allocation2 + $0x108] sm:$0xf] %v924
    %929 = vst [vmem:[#allocation2 + $0x110] sm:$0xf] %v925
    %930 = vst [vmem:[#allocation2 + $0x118] sm:$0xf] %v926
    %v931 = vld [vmem:[#allocation9] sm:$0xf]
    %v932 = vld [vmem:[#allocation2] sm:$0xff]
    %v933 = vld [vmem:[#allocation2 + $0x8] sm:$0xff]
    %v934 = vld [vmem:[#allocation2 + $0x10] sm:$0xff]
    %v935 = vld [vmem:[#allocation2 + $0x18] sm:$0xff]
    %v936 = vld [vmem:[#allocation2 + $0x20] sm:$0xff]
    %v937 = vld [vmem:[#allocation2 + $0x28] sm:$0xff]
    %v938 = vld [vmem:[#allocation2 + $0x30] sm:$0xff]
    %v939 = vld [vmem:[#allocation2 + $0x38] sm:$0xff]
    %v940 = vld [vmem:[#allocation2 + $0x40] sm:$0xff]
    %v941 = vld [vmem:[#allocation2 + $0x48] sm:$0xff]
    %v942 = vld [vmem:[#allocation2 + $0x50] sm:$0xff]
    %v943 = vld [vmem:[#allocation2 + $0x58] sm:$0xff]
    %v944 = vld [vmem:[#allocation2 + $0x60] sm:$0xff]
    %v945 = vld [vmem:[#allocation2 + $0x68] sm:$0xff]
    %v946 = vld [vmem:[#allocation2 + $0x70] sm:$0xff]
    %v947 = vld [vmem:[#allocation2 + $0x78] sm:$0xff]
    %v948 = vld [vmem:[#allocation2 + $0x80] sm:$0xff]
    %v949 = vld [vmem:[#allocation2 + $0x88] sm:$0xff]
    %v950 = vld [vmem:[#allocation2 + $0x90] sm:$0xff]
    %v951 = vld [vmem:[#allocation2 + $0x98] sm:$0xff]
    %v952 = vld [vmem:[#allocation2 + $0xa0] sm:$0xff]
    %v953 = vld [vmem:[#allocation2 + $0xa8] sm:$0xff]
    %v954 = vld [vmem:[#allocation2 + $0xb0] sm:$0xff]
    %v955 = vld [vmem:[#allocation2 + $0xb8] sm:$0xff]
    %v956 = vld [vmem:[#allocation2 + $0xc0] sm:$0xff]
    %v957 = vld [vmem:[#allocation2 + $0xc8] sm:$0xff]
    %v958 = vld [vmem:[#allocation2 + $0xd0] sm:$0xff]
    %v959 = vld [vmem:[#allocation2 + $0xd8] sm:$0xff]
    %v960 = vld [vmem:[#allocation2 + $0xe0] sm:$0xff]
    %v961 = vld [vmem:[#allocation2 + $0xe8] sm:$0xff]
    %v962 = vld [vmem:[#allocation2 + $0xf0] sm:$0xff]
    %v963 = vld [vmem:[#allocation2 + $0xf8] sm:$0xff]
    %v964 = vld [vmem:[#allocation2 + $0x100] sm:$0xff]
    %v965 = vld [vmem:[#allocation2 + $0x108] sm:$0xff]
    %v966 = vld [vmem:[#allocation2 + $0x110] sm:$0xff]
    %v967 = vld [vmem:[#allocation2 + $0x118] sm:$0xff]
    %v969 = vsel %vm559, %v931, 0
    %971 = vmatpush.msra.mxu0 0.0
    %972 = vmatpush.msra.mxu0 0.0
    %973 = vmatpush.msra.mxu0 0.0
    %974 = vmatpush.msra.mxu0 0.0
    %975 = vmatpush.msra.mxu0 0.0
    %976 = vmatpush.msra.mxu0 0.0
    %977 = vmatpush.msra.mxu0 0.0
    %978 = vmatpush.msra.mxu0 %v964
    %979 = vmatpush.msra.mxu0 %v960
    %980 = vmatpush.msra.mxu0 %v956
    %981 = vmatpush.msra.mxu0 %v952
    %982 = vmatpush.msra.mxu0 %v948
    %983 = vmatpush.msra.mxu0 %v944
    %984 = vmatpush.msra.mxu0 %v940
    %985 = vmatpush.msra.mxu0 %v936
    %986 = vmatpush.msra.mxu0 %v932
    %987 = vmatmul.f32.gmra.mxu0 %v969
    %v988 = vpop.f32.mrf.mxu0
    %v989 = vadd.f32 0.0, %v988
    %990 = vdwg.mxu0
    %991 = vmatpush.msra.mxu0 0.0
    %992 = vmatpush.msra.mxu0 0.0
    %993 = vmatpush.msra.mxu0 0.0
    %994 = vmatpush.msra.mxu0 0.0
    %995 = vmatpush.msra.mxu0 0.0
    %996 = vmatpush.msra.mxu0 0.0
    %997 = vmatpush.msra.mxu0 0.0
    %998 = vmatpush.msra.mxu0 %v965
    %999 = vmatpush.msra.mxu0 %v961
    %1000 = vmatpush.msra.mxu0 %v957
    %1001 = vmatpush.msra.mxu0 %v953
    %1002 = vmatpush.msra.mxu0 %v949
    %1003 = vmatpush.msra.mxu0 %v945
    %1004 = vmatpush.msra.mxu0 %v941
    %1005 = vmatpush.msra.mxu0 %v937
    %1006 = vmatpush.msra.mxu0 %v933
    %1007 = vmatmul.f32.gmra.mxu0 %v969
    %v1008 = vpop.f32.mrf.mxu0
    %v1009 = vadd.f32 0.0, %v1008
    %1010 = vdwg.mxu0
    %1011 = vmatpush.msra.mxu0 0.0
    %1012 = vmatpush.msra.mxu0 0.0
    %1013 = vmatpush.msra.mxu0 0.0
    %1014 = vmatpush.msra.mxu0 0.0
    %1015 = vmatpush.msra.mxu0 0.0
    %1016 = vmatpush.msra.mxu0 0.0
    %1017 = vmatpush.msra.mxu0 0.0
    %1018 = vmatpush.msra.mxu0 %v966
    %1019 = vmatpush.msra.mxu0 %v962
    %1020 = vmatpush.msra.mxu0 %v958
    %1021 = vmatpush.msra.mxu0 %v954
    %1022 = vmatpush.msra.mxu0 %v950
    %1023 = vmatpush.msra.mxu0 %v946
    %1024 = vmatpush.msra.mxu0 %v942
    %1025 = vmatpush.msra.mxu0 %v938
    %1026 = vmatpush.msra.mxu0 %v934
    %1027 = vmatmul.f32.gmra.mxu0 %v969
    %v1028 = vpop.f32.mrf.mxu0
    %v1029 = vadd.f32 0.0, %v1028
    %1030 = vdwg.mxu0
    %1031 = vmatpush.msra.mxu0 0.0
    %1032 = vmatpush.msra.mxu0 0.0
    %1033 = vmatpush.msra.mxu0 0.0
    %1034 = vmatpush.msra.mxu0 0.0
    %1035 = vmatpush.msra.mxu0 0.0
    %1036 = vmatpush.msra.mxu0 0.0
    %1037 = vmatpush.msra.mxu0 0.0
    %1038 = vmatpush.msra.mxu0 %v967
    %1039 = vmatpush.msra.mxu0 %v963
    %1040 = vmatpush.msra.mxu0 %v959
    %1041 = vmatpush.msra.mxu0 %v955
    %1042 = vmatpush.msra.mxu0 %v951
    %1043 = vmatpush.msra.mxu0 %v947
    %1044 = vmatpush.msra.mxu0 %v943
    %1045 = vmatpush.msra.mxu0 %v939
    %1046 = vmatpush.msra.mxu0 %v935
    %1047 = vmatmul.f32.gmra.mxu0 %v969
    %v1048 = vpop.f32.mrf.mxu0
    %v1049 = vadd.f32 0.0, %v1048
    %1050 = vdwg.mxu0
    %v1051 = vmul.f32 %v989, 0.5
    %v1052 = vmul.f32 %v1009, 0.5
    %v1053 = vmul.f32 %v1029, 0.5
    %v1054 = vmul.f32 %v1049, 0.5
    %1055 = vst [vmem:[#allocation1] ss:$2 sm:$0xff] %v118
    %s1056 = scalar_lea.vmem [#allocation1], 16
    %1057 = vst [vmem:[%s1056] ss:$2 sm:$0xff] %v119
    %v1058 = vld.sshfl [vmem:[#allocation1] sm:$0xff pattern:$0x75316420]
    %v1059 = vld.sshfl [vmem:[#allocation1 + $0x8] sm:$0xff pattern:$0x75316420]
    %v1060 = vld.sshfl [vmem:[#allocation1 + $0x10] sm:$0xff pattern:$0x75316420]
    %v1061 = vld.sshfl [vmem:[#allocation1 + $0x18] sm:$0xff pattern:$0x75316420]
    %v1066 = vadd.f32 %v1051, %v1058
    %v1067 = vadd.f32 %v1052, %v1059
    %v1068 = vadd.f32 %v1053, %v1060
    %v1069 = vadd.f32 %v1054, %v1061
    %v1074 = vrot.slane %v1067, 4
    %v1075 = vrot.slane %v1069, 4
    %vm1076 = vcmask 1043456
    %v1077 = vsel %vm1076, %v1066, %v1074
    %v1078 = vsel %vm1076, %v1068, %v1075
    %1081 = vst [vmem:[#allocation11] sm:$0xff] %v1077
    %1082 = vst [vmem:[#allocation11 + $0x8] sm:$0xff] %v1078
    // Predicated region
    $region34: #{tpu_custom_call.1} parent=1 // pred_check
      _
    $region35: #{tpu_custom_call.1} parent=1 // pred_check_branch
      %1084 = sbr.rel (0) target = $region37
    $region36: #{tpu_custom_call.1} parent=1 // pred_region
      %1086 = vsyncadd [#allocation5], 0
      %s1088 = sshll.u32 [#allocation11], 4
      %s1089 = int_to_ptr.vmem [resolvable:$true] %s1088
      %s1090 = sshll.u32 %s4, 4
      %s1091 = int_to_ptr.hbm [resolvable:$true] %s1090
      %1093 = dma.vmem_to_hbm [thread:$0]  %s1089, 256, %s1091, [#allocation5]
    $region37: #{tpu_custom_call.1} parent=1 // pred_fallthru
      _
    // Predicated region
    $region38: #{tpu_custom_call.1} parent=1 // pred_check
      _
    $region39: #{tpu_custom_call.1} parent=1 // pred_check_branch
      %1095 = sbr.rel (0) target = $region41
    $region40: #{tpu_custom_call.1} parent=1 // pred_region
      %1097 = dma.done [#allocation5], 256
    $region41: #{tpu_custom_call.1} parent=1 // pred_fallthru
      _
    %1098 = vsyncpa [#allocation4], 1
    %1099 = vsyncpa [#allocation7], 1
    %1100 = vsyncpa [#allocation10], 1
    %1101 = vsyncpa [#allocation5], 1

</llo_original>
